<compile_context>
chip_gen: v5e
topology: v5e:2x2
jax: 0.10.0
libtpu: 0.0.40
codegen_flags: <defaults>
</compile_context>

<pallas_src>
import functools

import jax
import jax.numpy as jnp
import numpy as np
from jax.experimental import pallas as pl
from jax.experimental.pallas import tpu as pltpu

TEMPORAL_W = 0.005      # temporal_consistency_weight
VOLATILITY_W = 0.002    # volatility_penalty_weight
SMOOTHNESS_W = 0.001    # smoothness_penalty_weight

_LANES = 128
_MAX_TILE_ROWS = 512                    # up to 512*128 = 65,536 samples / grid step
_VMEM_INPUT_BUDGET = 12 * 1024 * 1024   # double-buffered input bytes per step
_PALLAS_MIN_N = 2048                    # below this, XLA-fused jnp beats pallas_call


def _adaptive_loss_kernel(p_ref, t_ref, f_ref, w_ref, out_ref,
                          acc_ref, ft_ref, fs_ref, carry_ref, *, n_valid):
    step = pl.program_id(0)
    last = pl.num_programs(0) - 1

    tr, lanes = p_ref.shape               # (tile_rows, 128), tile_rows % 8 == 0
    nfeat = f_ref.shape[0]
    nsub = tr // 8                         # vreg-rows per tile

    @pl.when(step == 0)
    def _init():
        acc_ref[...] = jnp.zeros_like(acc_ref)
        ft_ref[...] = jnp.zeros_like(ft_ref)
        fs_ref[...] = jnp.zeros_like(fs_ref)
        carry_ref[...] = jnp.zeros_like(carry_ref)

    p = p_ref[...]                         # (tr, 128) f32, zero-padded past n_valid
    t = t_ref[...]

    def reduce_rows(x):
        # (tr,128) -> (8,128): fold the sublane groups with plain vreg adds so the
        # persistent accumulators stay one vreg per quantity (no tile-sized RMW).
        return jnp.sum(x.reshape(nsub, 8, lanes), axis=0)

    lrow = jax.lax.broadcasted_iota(jnp.int32, (tr, lanes), 0)
    lane = jax.lax.broadcasted_iota(jnp.int32, (tr, lanes), 1)
    first_pos = (lrow == 0) & (lane == 0)  # first element of this tile

    # Carried boundary values from the previous tile (as (1,1) broadcasts).
    c_p = carry_ref[0:1, 0:1]
    c_dp = carry_ref[1:2, 0:1]
    c_t = carry_ref[2:3, 0:1]

    def prev_elem(x, carry):
        # prev[r, l] == x at global index g-1, built from XLU rolls (no misaligned
        # slices): lane-roll for l>=1, lane+sublane roll for the row boundary,
        # carried scalar for the tile boundary.
        lp = pltpu.roll(x, 1, axis=1)
        prev = jnp.where(lane == 0, pltpu.roll(lp, 1, axis=0), lp)
        return jnp.where(first_pos, carry, prev)

    dp = p - prev_elem(p, c_p)             # backward first difference (predictions)
    dt = t - prev_elem(t, c_t)             # backward first difference (target)
    d2p = dp - prev_elem(dp, c_dp)         # backward second difference (predictions)

    # Always-valid partials (zero padding makes the tail contribute exactly 0).
    acc_ref[0, :, :] += reduce_rows((p - t) * (p - t))   # SSE
    acc_ref[1, :, :] += reduce_rows(t)                   # sum(target)

    # Per-feature covariance partials: sum(f * t) and sum(f).  F is small -> static.
    for j in range(nfeat):
        fj = f_ref[j, :, :]
        ft_ref[j, :, :] += reduce_rows(fj * t)
        fs_ref[j, :, :] += reduce_rows(fj)

    def accum_diffs(dp_v, dt_v, absdp_v, absd2p_v):
        acc_ref[2, :, :] += reduce_rows(absdp_v)
        acc_ref[3, :, :] += reduce_rows(dp_v)
        acc_ref[4, :, :] += reduce_rows(dp_v * dp_v)
        acc_ref[5, :, :] += reduce_rows(dt_v)
        acc_ref[6, :, :] += reduce_rows(dt_v * dt_v)
        acc_ref[7, :, :] += reduce_rows(absd2p_v)

    # Masks are only needed on the first tile (no diff at g=0,1) and the last tile
    # (zero-padded tail); interior tiles take an unmasked fast path.
    is_edge = (step == 0) | (step == last)

    @pl.when(is_edge)
    def _edge():
        g = (lrow + step * tr) * lanes + lane            # global sample index
        valid_d1 = (g >= 1) & (g <= n_valid - 1)         # N-1 first differences
        valid_d2 = (g >= 2) & (g <= n_valid - 1)         # N-2 second differences
        dp_m = jnp.where(valid_d1, dp, 0.0)
        dt_m = jnp.where(valid_d1, dt, 0.0)
        accum_diffs(dp_m, dt_m, jnp.abs(dp_m),
                    jnp.where(valid_d2, jnp.abs(d2p), 0.0))

    @pl.when(jnp.logical_not(is_edge))
    def _interior():
        accum_diffs(dp, dt, jnp.abs(dp), jnp.abs(d2p))

    # Carry boundary elements for the next tile's diffs (sliced from loaded values).
    p_last = p[tr - 1:tr, lanes - 1:lanes]
    p_prev = p[tr - 1:tr, lanes - 2:lanes - 1]
    carry_ref[0:1, 0:1] = p_last
    carry_ref[1:2, 0:1] = p_last - p_prev
    carry_ref[2:3, 0:1] = t[tr - 1:tr, lanes - 1:lanes]

    @pl.when(step == last)
    def _finalize():
        n = n_valid
        m = n - 1                                        # number of first diffs
        inv_n = 1.0 / n

        s_sse = jnp.sum(acc_ref[0, :, :])
        s_t = jnp.sum(acc_ref[1, :, :])
        s_absdp = jnp.sum(acc_ref[2, :, :])
        s_dp = jnp.sum(acc_ref[3, :, :])
        s_dp2 = jnp.sum(acc_ref[4, :, :])
        s_dt = jnp.sum(acc_ref[5, :, :])
        s_dt2 = jnp.sum(acc_ref[6, :, :])
        s_absd2p = jnp.sum(acc_ref[7, :, :])

        mse = s_sse * inv_n
        temporal = s_absdp / m
        # torch.std default (unbiased, ddof=1) via one-pass moments.
        var_dp = (s_dp2 - s_dp * s_dp / m) / (m - 1)
        var_dt = (s_dt2 - s_dt * s_dt / m) / (m - 1)
        volatility = jnp.abs(jnp.sqrt(jnp.maximum(var_dp, 0.0))
                             - jnp.sqrt(jnp.maximum(var_dt, 0.0)))
        smoothness = s_absd2p / (n - 2)

        out_lane = jax.lax.broadcasted_iota(jnp.int32, out_ref.shape, 1)
        out = jnp.zeros(out_ref.shape, jnp.float32)
        for j in range(nfeat):                           # static unroll, F is small
            s_ft = jnp.sum(ft_ref[j, :, :])
            s_f = jnp.sum(fs_ref[j, :, :])
            cov_j = jnp.abs((s_ft - s_f * s_t * inv_n) * inv_n)
            out = jnp.where(out_lane == 1 + j, cov_j, out)

        # Weighted correlation term: w_ref is zero outside lanes [1, nfeat].
        total_corr = jnp.sum(w_ref[...] * out)

        total = (mse + total_corr
                 + TEMPORAL_W * temporal
                 + VOLATILITY_W * volatility
                 + SMOOTHNESS_W * smoothness)

        out = jnp.where(out_lane == 0, total, out)
        out = jnp.where(out_lane == nfeat + 1, temporal, out)
        out = jnp.where(out_lane == nfeat + 2, volatility, out)
        out = jnp.where(out_lane == nfeat + 3, smoothness, out)
        out_ref[...] = out


def _pick_tiling(n, nfeat, tile_rows_max):
    r = -(-n // _LANES)                                  # rows of 128 lanes
    per_row = (2 + nfeat) * _LANES * 4 * 2               # double-buffered bytes / row
    vmem_rows = max(8, (_VMEM_INPUT_BUDGET // per_row) // 8 * 8)
    cap = max(8, min(int(tile_rows_max), vmem_rows))
    if r <= cap:
        return max(8, -(-r // 8) * 8), 1                 # single tile, multiple of 8
    return cap, -(-r // cap)


@functools.partial(jax.jit, static_argnames=("tile_rows_max",))
def _adaptive_loss_pallas(predictions, target, features, w, *, tile_rows_max):
    n = predictions.shape[0]
    nfeat = features.shape[1]
    tile_rows, num_tiles = _pick_tiling(n, nfeat, tile_rows_max)
    n_pad = num_tiles * tile_rows * _LANES

    def to_slab(x):                                      # (n,...) -> padded (rows,128)
        x = jnp.pad(x.reshape(n).astype(jnp.float32), (0, n_pad - n))
        return x.reshape(num_tiles * tile_rows, _LANES)

    p2 = to_slab(predictions)
    t2 = to_slab(target)
    # TODO(synk): features arrive (N, F); the (F, N) relayout below costs one extra
    # HBM pass over the largest input -- keep features in (F, N) layout upstream to
    # drop it entirely.
    f3 = jnp.pad(features.astype(jnp.float32).T, ((0, 0), (0, n_pad - n)))
    f3 = f3.reshape(nfeat, num_tiles * tile_rows, _LANES)
    # Weights placed on lanes [1, nfeat] so they align with the packed covariances.
    w_row = jnp.zeros((1, _LANES), jnp.float32).at[0, 1:1 + nfeat].set(w)

    kernel = functools.partial(_adaptive_loss_kernel, n_valid=n)

    return pl.pallas_call(
        kernel,
        out_shape=jax.ShapeDtypeStruct((1, _LANES), jnp.float32),
        grid_spec=pltpu.PrefetchScalarGridSpec(
            num_scalar_prefetch=0,
            grid=(num_tiles,),
            in_specs=[
                pl.BlockSpec((tile_rows, _LANES), lambda i: (i, 0)),
                pl.BlockSpec((tile_rows, _LANES), lambda i: (i, 0)),
                pl.BlockSpec((nfeat, tile_rows, _LANES), lambda i: (0, i, 0)),
                pl.BlockSpec((1, _LANES), lambda i: (0, 0)),
            ],
            out_specs=pl.BlockSpec((1, _LANES), lambda i: (0, 0)),
            scratch_shapes=[
                pltpu.VMEM((8, 8, _LANES), jnp.float32),       # scalar partial sums
                pltpu.VMEM((nfeat, 8, _LANES), jnp.float32),   # sum(f * t) partials
                pltpu.VMEM((nfeat, 8, _LANES), jnp.float32),   # sum(f) partials
                pltpu.VMEM((8, _LANES), jnp.float32),          # cross-tile carries
            ]),
        compiler_params=pltpu.CompilerParams(
            dimension_semantics=("arbitrary",),   # carries/accumulators => sequential
            vmem_limit_bytes=32 * 1024 * 1024),
    )(p2, t2, f3, w_row)


@jax.jit
def _adaptive_loss_small(predictions, target, features, w):
    # Tiny-N fallback: pallas_call fixed overhead dominates, let XLA fuse it.
    n = predictions.shape[0]
    nfeat = features.shape[1]
    p = predictions.reshape(n).astype(jnp.float32)
    t = target.reshape(n).astype(jnp.float32)
    f = features.astype(jnp.float32)

    mse = jnp.mean((p - t) ** 2)
    t_c = t - jnp.mean(t)
    covs = jnp.abs(jnp.mean((f - jnp.mean(f, axis=0)) * t_c[:, None], axis=0))
    dp = jnp.diff(p)
    dt = jnp.diff(t)
    temporal = jnp.mean(jnp.abs(dp))
    volatility = jnp.abs(jnp.std(dp, ddof=1) - jnp.std(dt, ddof=1))
    smoothness = jnp.mean(jnp.abs(jnp.diff(dp)))
    total = (mse + jnp.sum(w * covs)
             + TEMPORAL_W * temporal + VOLATILITY_W * volatility
             + SMOOTHNESS_W * smoothness)

    packed = jnp.zeros((1, _LANES), jnp.float32)
    packed = packed.at[0, 0].set(total)
    packed = packed.at[0, 1:1 + nfeat].set(covs)
    packed = packed.at[0, nfeat + 1].set(temporal)
    packed = packed.at[0, nfeat + 2].set(volatility)
    packed = packed.at[0, nfeat + 3].set(smoothness)
    return packed


def adaptive_loss_forward(predictions, target, features, feature_names, weights,
                          *, tile_rows_max=_MAX_TILE_ROWS):
    """Mirrors AdaptiveLossFunction.forward.

    predictions, target: (N, 1); features: (N, F).
    Returns (total_loss [0-d device array], correlation_losses dict of floats).
    """
    n = int(predictions.shape[0])
    nfeat = int(features.shape[1])
    assert nfeat == len(feature_names)
    assert n >= 3, "kernel assumes N >= 3 (the <2/<3 torch early-outs never trigger)"

    if isinstance(weights, dict):
        w_vec = jnp.asarray([weights[name] for name in feature_names], dtype=jnp.float32)
    else:
        w_vec = jnp.asarray(weights, dtype=jnp.float32)

    if n < _PALLAS_MIN_N:
        packed = _adaptive_loss_small(predictions, target, features, w_vec)
    else:
        packed = _adaptive_loss_pallas(predictions, target, features, w_vec,
                                       tile_rows_max=tile_rows_max)

    host = np.asarray(jax.device_get(packed))            # one bulk transfer for the dict
    correlation_losses = {name: float(host[0, 1 + i])
                          for i, name in enumerate(feature_names)}
    correlation_losses['temporal_consistency'] = float(host[0, nfeat + 1])
    correlation_losses['volatility_penalty'] = float(host[0, nfeat + 2])
    correlation_losses['smoothness_penalty'] = float(host[0, nfeat + 3])
    # TODO(synk): host-side history bookkeeping (covariance_history / prediction_history
    # / target_history appends) is Python state outside the kernel.
    return packed[0, 0], correlation_losses


def _reference(predictions, target, features, feature_names, weights):
    """Pure-JAX reference mirroring the PyTorch semantics."""
    p = predictions[:, 0].astype(jnp.float32)
    t = target[:, 0].astype(jnp.float32)
    mse = jnp.mean((p - t) ** 2)
    t_c = t - jnp.mean(t)
    total = mse
    losses = {}
    for i, name in enumerate(feature_names):
        fc = features[:, i].astype(jnp.float32) - jnp.mean(features[:, i])
        cov = jnp.abs(jnp.mean(fc * t_c))
        losses[name] = float(cov)
        total = total + weights[name] * cov
    dp = jnp.diff(p)
    dt = jnp.diff(t)
    temporal = jnp.mean(jnp.abs(dp))
    vol = jnp.abs(jnp.std(dp, ddof=1) - jnp.std(dt, ddof=1))
    smooth = jnp.mean(jnp.abs(jnp.diff(dp)))
    total = total + TEMPORAL_W * temporal + VOLATILITY_W * vol + SMOOTHNESS_W * smooth
    losses['temporal_consistency'] = float(temporal)
    losses['volatility_penalty'] = float(vol)
    losses['smoothness_penalty'] = float(smooth)
    return float(total), losses


if __name__ == "__main__":
    key = jax.random.PRNGKey(0)
    k1, k2, k3 = jax.random.split(key, 3)

    N, F = 5000, 4
    feature_names = ["close_lag1", "volume", "rsi", "macd"]
    # Deterministic default weights from __init__: 0.1 for first feature, 0.05 otherwise.
    weights = {name: (0.1 if i == 0 else 0.05) for i, name in enumerate(feature_names)}

    predictions = jax.random.normal(k1, (N, 1), dtype=jnp.float32)
    target = jax.random.normal(k2, (N, 1), dtype=jnp.float32)
    features = jax.random.normal(k3, (N, F), dtype=jnp.float32)

    ref_total, ref_losses = _reference(predictions, target, features,
                                       feature_names, weights)

    # 1) Default Pallas path (single streaming tile at this N).
    total_loss, corr_losses = adaptive_loss_forward(
        predictions, target, features, feature_names, weights)
    total_loss = jax.block_until_ready(total_loss)
    assert np.allclose(float(total_loss), ref_total, rtol=1e-4, atol=1e-4), (
        float(total_loss), ref_total)
    for k in ref_losses:
        assert np.allclose(corr_losses[k], ref_losses[k], rtol=2e-3, atol=2e-4), (
            k, corr_losses[k], ref_losses[k])

    # 2) Forced multi-tile path: exercises cross-tile carries, unmasked interior tiles
    #    and the zero-padded tail at small N.
    total_mt, corr_mt = adaptive_loss_forward(
        predictions, target, features, feature_names, weights, tile_rows_max=8)
    total_mt = jax.block_until_ready(total_mt)
    assert np.allclose(float(total_mt), ref_total, rtol=1e-4, atol=1e-4), (
        float(total_mt), ref_total)
    for k in ref_losses:
        assert np.allclose(corr_mt[k], ref_losses[k], rtol=2e-3, atol=2e-4), (
            k, corr_mt[k], ref_losses[k])

    # 3) Tiny-N path (XLA-fused fallback) sanity check.
    n_small = 100
    tl2, _ = adaptive_loss_forward(predictions[:n_small], target[:n_small],
                                   features[:n_small], feature_names, weights)
    rt2, _ = _reference(predictions[:n_small], target[:n_small],
                        features[:n_small], feature_names, weights)
    assert np.allclose(float(jax.block_until_ready(tl2)), rt2, rtol=1e-4, atol=1e-4), (
        float(tl2), rt2)

    print("KERNEL_OK")
</pallas_src>

<mosaic_0001>
module attributes {stable_mosaic.version = 11 : i64} {
  func.func @_adaptive_loss_kernel(%arg0: i32, %arg1: memref<40x128xf32, #tpu.memory_space<vmem>>, %arg2: memref<40x128xf32, #tpu.memory_space<vmem>>, %arg3: memref<4x40x128xf32, #tpu.memory_space<vmem>>, %arg4: memref<1x128xf32, #tpu.memory_space<vmem>>, %arg5: memref<1x128xf32, #tpu.memory_space<vmem>>, %arg6: memref<8x8x128xf32, #tpu.memory_space<vmem>>, %arg7: memref<4x8x128xf32, #tpu.memory_space<vmem>>, %arg8: memref<4x8x128xf32, #tpu.memory_space<vmem>>, %arg9: memref<8x128xf32, #tpu.memory_space<vmem>>) attributes {dimension_semantics = [#tpu.dimension_semantics<arbitrary>], iteration_bounds = array<i64: 1>, scalar_prefetch = 0 : i64, scratch_operands = 4 : i64, tpu.core_type = #tpu.core_type<tc>, window_params = [{transform_indices = @transform_0, window_bounds = array<i64: 40, 128>}, {transform_indices = @transform_1, window_bounds = array<i64: 40, 128>}, {transform_indices = @transform_2, window_bounds = array<i64: 4, 40, 128>}, {pipeline_mode = #tpu.pipeline_mode<synchronous>, transform_indices = @transform_3, window_bounds = array<i64: 1, 128>}, {pipeline_mode = #tpu.pipeline_mode<synchronous>, transform_indices = @transform_4, window_bounds = array<i64: 1, 128>}]} {
    %c0_i32 = arith.constant 0 : i32
    %0 = arith.cmpi eq, %arg0, %c0_i32 : i32
    %1 = arith.extui %0 : i1 to i32
    %c0_i32_0 = arith.constant 0 : i32
    %2 = arith.cmpi ne, %1, %c0_i32_0 : i32
    scf.if %2 {
      %cst_110 = arith.constant 0.000000e+00 : f32
      %155 = vector.broadcast %cst_110 : f32 to vector<8x8x128xf32>
      %c0_111 = arith.constant 0 : index
      %c0_112 = arith.constant 0 : index
      %c0_113 = arith.constant 0 : index
      %156 = vector.load %arg6[%c0_111, %c0_112, %c0_113] : memref<8x8x128xf32, #tpu.memory_space<vmem>>, vector<8x8x128xf32>
      tpu.vector_store %arg6[%c0_111, %c0_112, %c0_113], %155 {strides = array<i32>} : memref<8x8x128xf32, #tpu.memory_space<vmem>>, vector<8x8x128xf32>,
      %cst_114 = arith.constant 0.000000e+00 : f32
      %157 = vector.broadcast %cst_114 : f32 to vector<4x8x128xf32>
      %c0_115 = arith.constant 0 : index
      %c0_116 = arith.constant 0 : index
      %c0_117 = arith.constant 0 : index
      %158 = vector.load %arg7[%c0_115, %c0_116, %c0_117] : memref<4x8x128xf32, #tpu.memory_space<vmem>>, vector<4x8x128xf32>
      tpu.vector_store %arg7[%c0_115, %c0_116, %c0_117], %157 {strides = array<i32>} : memref<4x8x128xf32, #tpu.memory_space<vmem>>, vector<4x8x128xf32>,
      %cst_118 = arith.constant 0.000000e+00 : f32
      %159 = vector.broadcast %cst_118 : f32 to vector<4x8x128xf32>
      %c0_119 = arith.constant 0 : index
      %c0_120 = arith.constant 0 : index
      %c0_121 = arith.constant 0 : index
      %160 = vector.load %arg8[%c0_119, %c0_120, %c0_121] : memref<4x8x128xf32, #tpu.memory_space<vmem>>, vector<4x8x128xf32>
      tpu.vector_store %arg8[%c0_119, %c0_120, %c0_121], %159 {strides = array<i32>} : memref<4x8x128xf32, #tpu.memory_space<vmem>>, vector<4x8x128xf32>,
      %cst_122 = arith.constant 0.000000e+00 : f32
      %161 = vector.broadcast %cst_122 : f32 to vector<8x128xf32>
      %c0_123 = arith.constant 0 : index
      %c0_124 = arith.constant 0 : index
      %162 = vector.load %arg9[%c0_123, %c0_124] : memref<8x128xf32, #tpu.memory_space<vmem>>, vector<8x128xf32>
      tpu.vector_store %arg9[%c0_123, %c0_124], %161 {strides = array<i32>} : memref<8x128xf32, #tpu.memory_space<vmem>>, vector<8x128xf32>,
    } else {
    }
    %c0 = arith.constant 0 : index
    %c0_1 = arith.constant 0 : index
    %3 = vector.load %arg1[%c0, %c0_1] : memref<40x128xf32, #tpu.memory_space<vmem>>, vector<40x128xf32>
    %c0_2 = arith.constant 0 : index
    %c0_3 = arith.constant 0 : index
    %4 = vector.load %arg2[%c0_2, %c0_3] : memref<40x128xf32, #tpu.memory_space<vmem>>, vector<40x128xf32>
    %5 = tpu.iota {dimensions = array<i32: 0>} : vector<40x128xi32>
    %6 = tpu.iota {dimensions = array<i32: 1>} : vector<40x128xi32>
    %c0_i32_4 = arith.constant 0 : i32
    %7 = vector.broadcast %c0_i32_4 : i32 to vector<40x128xi32>
    %8 = arith.cmpi eq, %5, %7 : vector<40x128xi32>
    %c0_i32_5 = arith.constant 0 : i32
    %9 = vector.broadcast %c0_i32_5 : i32 to vector<40x128xi32>
    %10 = arith.cmpi eq, %6, %9 : vector<40x128xi32>
    %11 = arith.andi %8, %10 : vector<40x128xi1>
    %c0_6 = arith.constant 0 : index
    %c0_7 = arith.constant 0 : index
    %12 = vector.load %arg9[%c0_6, %c0_7] : memref<8x128xf32, #tpu.memory_space<vmem>>, vector<1x1xf32>
    %c1 = arith.constant 1 : index
    %c0_8 = arith.constant 0 : index
    %13 = vector.load %arg9[%c1, %c0_8] : memref<8x128xf32, #tpu.memory_space<vmem>>, vector<1x1xf32>
    %c2 = arith.constant 2 : index
    %c0_9 = arith.constant 0 : index
    %14 = vector.load %arg9[%c2, %c0_9] : memref<8x128xf32, #tpu.memory_space<vmem>>, vector<1x1xf32>
    %c1_i32 = arith.constant 1 : i32
    %15 = tpu.dynamic_rotate %3 by %c1_i32 dim 1 : vector<40x128xf32>, i32 -> vector<40x128xf32>
    %c0_i32_10 = arith.constant 0 : i32
    %16 = vector.broadcast %c0_i32_10 : i32 to vector<40x128xi32>
    %17 = arith.cmpi eq, %6, %16 : vector<40x128xi32>
    %c1_i32_11 = arith.constant 1 : i32
    %18 = tpu.dynamic_rotate %15 by %c1_i32_11 dim 0 : vector<40x128xf32>, i32 -> vector<40x128xf32>
    %19 = arith.select %17, %18, %15 : vector<40x128xi1>, vector<40x128xf32>
    %20 = vector.shape_cast %12 : vector<1x1xf32> to vector<1x1xf32>
    %21 = vector.broadcast %20 : vector<1x1xf32> to vector<40x128xf32>
    %22 = arith.select %11, %21, %19 : vector<40x128xi1>, vector<40x128xf32>
    %23 = arith.subf %3, %22 : vector<40x128xf32>
    %c1_i32_12 = arith.constant 1 : i32
    %24 = tpu.dynamic_rotate %4 by %c1_i32_12 dim 1 : vector<40x128xf32>, i32 -> vector<40x128xf32>
    %c0_i32_13 = arith.constant 0 : i32
    %25 = vector.broadcast %c0_i32_13 : i32 to vector<40x128xi32>
    %26 = arith.cmpi eq, %6, %25 : vector<40x128xi32>
    %c1_i32_14 = arith.constant 1 : i32
    %27 = tpu.dynamic_rotate %24 by %c1_i32_14 dim 0 : vector<40x128xf32>, i32 -> vector<40x128xf32>
    %28 = arith.select %26, %27, %24 : vector<40x128xi1>, vector<40x128xf32>
    %29 = vector.shape_cast %14 : vector<1x1xf32> to vector<1x1xf32>
    %30 = vector.broadcast %29 : vector<1x1xf32> to vector<40x128xf32>
    %31 = arith.select %11, %30, %28 : vector<40x128xi1>, vector<40x128xf32>
    %32 = arith.subf %4, %31 : vector<40x128xf32>
    %c1_i32_15 = arith.constant 1 : i32
    %33 = tpu.dynamic_rotate %23 by %c1_i32_15 dim 1 : vector<40x128xf32>, i32 -> vector<40x128xf32>
    %c0_i32_16 = arith.constant 0 : i32
    %34 = vector.broadcast %c0_i32_16 : i32 to vector<40x128xi32>
    %35 = arith.cmpi eq, %6, %34 : vector<40x128xi32>
    %c1_i32_17 = arith.constant 1 : i32
    %36 = tpu.dynamic_rotate %33 by %c1_i32_17 dim 0 : vector<40x128xf32>, i32 -> vector<40x128xf32>
    %37 = arith.select %35, %36, %33 : vector<40x128xi1>, vector<40x128xf32>
    %38 = vector.shape_cast %13 : vector<1x1xf32> to vector<1x1xf32>
    %39 = vector.broadcast %38 : vector<1x1xf32> to vector<40x128xf32>
    %40 = arith.select %11, %39, %37 : vector<40x128xi1>, vector<40x128xf32>
    %41 = arith.subf %23, %40 : vector<40x128xf32>
    %c0_18 = arith.constant 0 : index
    %c0_19 = arith.constant 0 : index
    %c0_20 = arith.constant 0 : index
    %42 = vector.load %arg6[%c0_18, %c0_19, %c0_20] : memref<8x8x128xf32, #tpu.memory_space<vmem>>, vector<1x8x128xf32>
    %43 = vector.shape_cast %42 : vector<1x8x128xf32> to vector<8x128xf32>
    %44 = arith.subf %3, %4 : vector<40x128xf32>
    %45 = arith.subf %3, %4 : vector<40x128xf32>
    %46 = arith.mulf %44, %45 : vector<40x128xf32>
    %47 = vector.shape_cast %46 : vector<40x128xf32> to vector<5x8x128xf32>
    %cst = arith.constant dense<0.000000e+00> : vector<8x128xf32>
    %48 = vector.multi_reduction <add>, %47, %cst [0] : vector<5x8x128xf32> to vector<8x128xf32>
    %49 = arith.addf %43, %48 : vector<8x128xf32>
    %c0_21 = arith.constant 0 : index
    %c0_22 = arith.constant 0 : index
    %c0_23 = arith.constant 0 : index
    %50 = vector.load %arg6[%c0_21, %c0_22, %c0_23] : memref<8x8x128xf32, #tpu.memory_space<vmem>>, vector<1x8x128xf32>
    %51 = vector.shape_cast %50 : vector<1x8x128xf32> to vector<8x128xf32>
    %52 = vector.shape_cast %49 : vector<8x128xf32> to vector<1x8x128xf32>
    tpu.vector_store %arg6[%c0_21, %c0_22, %c0_23], %52 {strides = array<i32>} : memref<8x8x128xf32, #tpu.memory_space<vmem>>, vector<1x8x128xf32>,
    %c1_24 = arith.constant 1 : index
    %c0_25 = arith.constant 0 : index
    %c0_26 = arith.constant 0 : index
    %53 = vector.load %arg6[%c1_24, %c0_25, %c0_26] : memref<8x8x128xf32, #tpu.memory_space<vmem>>, vector<1x8x128xf32>
    %54 = vector.shape_cast %53 : vector<1x8x128xf32> to vector<8x128xf32>
    %55 = vector.shape_cast %4 : vector<40x128xf32> to vector<5x8x128xf32>
    %cst_27 = arith.constant dense<0.000000e+00> : vector<8x128xf32>
    %56 = vector.multi_reduction <add>, %55, %cst_27 [0] : vector<5x8x128xf32> to vector<8x128xf32>
    %57 = arith.addf %54, %56 : vector<8x128xf32>
    %c1_28 = arith.constant 1 : index
    %c0_29 = arith.constant 0 : index
    %c0_30 = arith.constant 0 : index
    %58 = vector.load %arg6[%c1_28, %c0_29, %c0_30] : memref<8x8x128xf32, #tpu.memory_space<vmem>>, vector<1x8x128xf32>
    %59 = vector.shape_cast %58 : vector<1x8x128xf32> to vector<8x128xf32>
    %60 = vector.shape_cast %57 : vector<8x128xf32> to vector<1x8x128xf32>
    tpu.vector_store %arg6[%c1_28, %c0_29, %c0_30], %60 {strides = array<i32>} : memref<8x8x128xf32, #tpu.memory_space<vmem>>, vector<1x8x128xf32>,
    %c0_31 = arith.constant 0 : index
    %c0_32 = arith.constant 0 : index
    %c0_33 = arith.constant 0 : index
    %61 = vector.load %arg3[%c0_31, %c0_32, %c0_33] : memref<4x40x128xf32, #tpu.memory_space<vmem>>, vector<1x40x128xf32>
    %62 = vector.shape_cast %61 : vector<1x40x128xf32> to vector<40x128xf32>
    %c0_34 = arith.constant 0 : index
    %c0_35 = arith.constant 0 : index
    %c0_36 = arith.constant 0 : index
    %63 = vector.load %arg7[%c0_34, %c0_35, %c0_36] : memref<4x8x128xf32, #tpu.memory_space<vmem>>, vector<1x8x128xf32>
    %64 = vector.shape_cast %63 : vector<1x8x128xf32> to vector<8x128xf32>
    %65 = arith.mulf %62, %4 : vector<40x128xf32>
    %66 = vector.shape_cast %65 : vector<40x128xf32> to vector<5x8x128xf32>
    %cst_37 = arith.constant dense<0.000000e+00> : vector<8x128xf32>
    %67 = vector.multi_reduction <add>, %66, %cst_37 [0] : vector<5x8x128xf32> to vector<8x128xf32>
    %68 = arith.addf %64, %67 : vector<8x128xf32>
    %c0_38 = arith.constant 0 : index
    %c0_39 = arith.constant 0 : index
    %c0_40 = arith.constant 0 : index
    %69 = vector.load %arg7[%c0_38, %c0_39, %c0_40] : memref<4x8x128xf32, #tpu.memory_space<vmem>>, vector<1x8x128xf32>
    %70 = vector.shape_cast %69 : vector<1x8x128xf32> to vector<8x128xf32>
    %71 = vector.shape_cast %68 : vector<8x128xf32> to vector<1x8x128xf32>
    tpu.vector_store %arg7[%c0_38, %c0_39, %c0_40], %71 {strides = array<i32>} : memref<4x8x128xf32, #tpu.memory_space<vmem>>, vector<1x8x128xf32>,
    %c0_41 = arith.constant 0 : index
    %c0_42 = arith.constant 0 : index
    %c0_43 = arith.constant 0 : index
    %72 = vector.load %arg8[%c0_41, %c0_42, %c0_43] : memref<4x8x128xf32, #tpu.memory_space<vmem>>, vector<1x8x128xf32>
    %73 = vector.shape_cast %72 : vector<1x8x128xf32> to vector<8x128xf32>
    %74 = vector.shape_cast %62 : vector<40x128xf32> to vector<5x8x128xf32>
    %cst_44 = arith.constant dense<0.000000e+00> : vector<8x128xf32>
    %75 = vector.multi_reduction <add>, %74, %cst_44 [0] : vector<5x8x128xf32> to vector<8x128xf32>
    %76 = arith.addf %73, %75 : vector<8x128xf32>
    %c0_45 = arith.constant 0 : index
    %c0_46 = arith.constant 0 : index
    %c0_47 = arith.constant 0 : index
    %77 = vector.load %arg8[%c0_45, %c0_46, %c0_47] : memref<4x8x128xf32, #tpu.memory_space<vmem>>, vector<1x8x128xf32>
    %78 = vector.shape_cast %77 : vector<1x8x128xf32> to vector<8x128xf32>
    %79 = vector.shape_cast %76 : vector<8x128xf32> to vector<1x8x128xf32>
    tpu.vector_store %arg8[%c0_45, %c0_46, %c0_47], %79 {strides = array<i32>} : memref<4x8x128xf32, #tpu.memory_space<vmem>>, vector<1x8x128xf32>,
    %c1_48 = arith.constant 1 : index
    %c0_49 = arith.constant 0 : index
    %c0_50 = arith.constant 0 : index
    %80 = vector.load %arg3[%c1_48, %c0_49, %c0_50] : memref<4x40x128xf32, #tpu.memory_space<vmem>>, vector<1x40x128xf32>
    %81 = vector.shape_cast %80 : vector<1x40x128xf32> to vector<40x128xf32>
    %c1_51 = arith.constant 1 : index
    %c0_52 = arith.constant 0 : index
    %c0_53 = arith.constant 0 : index
    %82 = vector.load %arg7[%c1_51, %c0_52, %c0_53] : memref<4x8x128xf32, #tpu.memory_space<vmem>>, vector<1x8x128xf32>
    %83 = vector.shape_cast %82 : vector<1x8x128xf32> to vector<8x128xf32>
    %84 = arith.mulf %81, %4 : vector<40x128xf32>
    %85 = vector.shape_cast %84 : vector<40x128xf32> to vector<5x8x128xf32>
    %cst_54 = arith.constant dense<0.000000e+00> : vector<8x128xf32>
    %86 = vector.multi_reduction <add>, %85, %cst_54 [0] : vector<5x8x128xf32> to vector<8x128xf32>
    %87 = arith.addf %83, %86 : vector<8x128xf32>
    %c1_55 = arith.constant 1 : index
    %c0_56 = arith.constant 0 : index
    %c0_57 = arith.constant 0 : index
    %88 = vector.load %arg7[%c1_55, %c0_56, %c0_57] : memref<4x8x128xf32, #tpu.memory_space<vmem>>, vector<1x8x128xf32>
    %89 = vector.shape_cast %88 : vector<1x8x128xf32> to vector<8x128xf32>
    %90 = vector.shape_cast %87 : vector<8x128xf32> to vector<1x8x128xf32>
    tpu.vector_store %arg7[%c1_55, %c0_56, %c0_57], %90 {strides = array<i32>} : memref<4x8x128xf32, #tpu.memory_space<vmem>>, vector<1x8x128xf32>,
    %c1_58 = arith.constant 1 : index
    %c0_59 = arith.constant 0 : index
    %c0_60 = arith.constant 0 : index
    %91 = vector.load %arg8[%c1_58, %c0_59, %c0_60] : memref<4x8x128xf32, #tpu.memory_space<vmem>>, vector<1x8x128xf32>
    %92 = vector.shape_cast %91 : vector<1x8x128xf32> to vector<8x128xf32>
    %93 = vector.shape_cast %81 : vector<40x128xf32> to vector<5x8x128xf32>
    %cst_61 = arith.constant dense<0.000000e+00> : vector<8x128xf32>
    %94 = vector.multi_reduction <add>, %93, %cst_61 [0] : vector<5x8x128xf32> to vector<8x128xf32>
    %95 = arith.addf %92, %94 : vector<8x128xf32>
    %c1_62 = arith.constant 1 : index
    %c0_63 = arith.constant 0 : index
    %c0_64 = arith.constant 0 : index
    %96 = vector.load %arg8[%c1_62, %c0_63, %c0_64] : memref<4x8x128xf32, #tpu.memory_space<vmem>>, vector<1x8x128xf32>
    %97 = vector.shape_cast %96 : vector<1x8x128xf32> to vector<8x128xf32>
    %98 = vector.shape_cast %95 : vector<8x128xf32> to vector<1x8x128xf32>
    tpu.vector_store %arg8[%c1_62, %c0_63, %c0_64], %98 {strides = array<i32>} : memref<4x8x128xf32, #tpu.memory_space<vmem>>, vector<1x8x128xf32>,
    %c2_65 = arith.constant 2 : index
    %c0_66 = arith.constant 0 : index
    %c0_67 = arith.constant 0 : index
    %99 = vector.load %arg3[%c2_65, %c0_66, %c0_67] : memref<4x40x128xf32, #tpu.memory_space<vmem>>, vector<1x40x128xf32>
    %100 = vector.shape_cast %99 : vector<1x40x128xf32> to vector<40x128xf32>
    %c2_68 = arith.constant 2 : index
    %c0_69 = arith.constant 0 : index
    %c0_70 = arith.constant 0 : index
    %101 = vector.load %arg7[%c2_68, %c0_69, %c0_70] : memref<4x8x128xf32, #tpu.memory_space<vmem>>, vector<1x8x128xf32>
    %102 = vector.shape_cast %101 : vector<1x8x128xf32> to vector<8x128xf32>
    %103 = arith.mulf %100, %4 : vector<40x128xf32>
    %104 = vector.shape_cast %103 : vector<40x128xf32> to vector<5x8x128xf32>
    %cst_71 = arith.constant dense<0.000000e+00> : vector<8x128xf32>
    %105 = vector.multi_reduction <add>, %104, %cst_71 [0] : vector<5x8x128xf32> to vector<8x128xf32>
    %106 = arith.addf %102, %105 : vector<8x128xf32>
    %c2_72 = arith.constant 2 : index
    %c0_73 = arith.constant 0 : index
    %c0_74 = arith.constant 0 : index
    %107 = vector.load %arg7[%c2_72, %c0_73, %c0_74] : memref<4x8x128xf32, #tpu.memory_space<vmem>>, vector<1x8x128xf32>
    %108 = vector.shape_cast %107 : vector<1x8x128xf32> to vector<8x128xf32>
    %109 = vector.shape_cast %106 : vector<8x128xf32> to vector<1x8x128xf32>
    tpu.vector_store %arg7[%c2_72, %c0_73, %c0_74], %109 {strides = array<i32>} : memref<4x8x128xf32, #tpu.memory_space<vmem>>, vector<1x8x128xf32>,
    %c2_75 = arith.constant 2 : index
    %c0_76 = arith.constant 0 : index
    %c0_77 = arith.constant 0 : index
    %110 = vector.load %arg8[%c2_75, %c0_76, %c0_77] : memref<4x8x128xf32, #tpu.memory_space<vmem>>, vector<1x8x128xf32>
    %111 = vector.shape_cast %110 : vector<1x8x128xf32> to vector<8x128xf32>
    %112 = vector.shape_cast %100 : vector<40x128xf32> to vector<5x8x128xf32>
    %cst_78 = arith.constant dense<0.000000e+00> : vector<8x128xf32>
    %113 = vector.multi_reduction <add>, %112, %cst_78 [0] : vector<5x8x128xf32> to vector<8x128xf32>
    %114 = arith.addf %111, %113 : vector<8x128xf32>
    %c2_79 = arith.constant 2 : index
    %c0_80 = arith.constant 0 : index
    %c0_81 = arith.constant 0 : index
    %115 = vector.load %arg8[%c2_79, %c0_80, %c0_81] : memref<4x8x128xf32, #tpu.memory_space<vmem>>, vector<1x8x128xf32>
    %116 = vector.shape_cast %115 : vector<1x8x128xf32> to vector<8x128xf32>
    %117 = vector.shape_cast %114 : vector<8x128xf32> to vector<1x8x128xf32>
    tpu.vector_store %arg8[%c2_79, %c0_80, %c0_81], %117 {strides = array<i32>} : memref<4x8x128xf32, #tpu.memory_space<vmem>>, vector<1x8x128xf32>,
    %c3 = arith.constant 3 : index
    %c0_82 = arith.constant 0 : index
    %c0_83 = arith.constant 0 : index
    %118 = vector.load %arg3[%c3, %c0_82, %c0_83] : memref<4x40x128xf32, #tpu.memory_space<vmem>>, vector<1x40x128xf32>
    %119 = vector.shape_cast %118 : vector<1x40x128xf32> to vector<40x128xf32>
    %c3_84 = arith.constant 3 : index
    %c0_85 = arith.constant 0 : index
    %c0_86 = arith.constant 0 : index
    %120 = vector.load %arg7[%c3_84, %c0_85, %c0_86] : memref<4x8x128xf32, #tpu.memory_space<vmem>>, vector<1x8x128xf32>
    %121 = vector.shape_cast %120 : vector<1x8x128xf32> to vector<8x128xf32>
    %122 = arith.mulf %119, %4 : vector<40x128xf32>
    %123 = vector.shape_cast %122 : vector<40x128xf32> to vector<5x8x128xf32>
    %cst_87 = arith.constant dense<0.000000e+00> : vector<8x128xf32>
    %124 = vector.multi_reduction <add>, %123, %cst_87 [0] : vector<5x8x128xf32> to vector<8x128xf32>
    %125 = arith.addf %121, %124 : vector<8x128xf32>
    %c3_88 = arith.constant 3 : index
    %c0_89 = arith.constant 0 : index
    %c0_90 = arith.constant 0 : index
    %126 = vector.load %arg7[%c3_88, %c0_89, %c0_90] : memref<4x8x128xf32, #tpu.memory_space<vmem>>, vector<1x8x128xf32>
    %127 = vector.shape_cast %126 : vector<1x8x128xf32> to vector<8x128xf32>
    %128 = vector.shape_cast %125 : vector<8x128xf32> to vector<1x8x128xf32>
    tpu.vector_store %arg7[%c3_88, %c0_89, %c0_90], %128 {strides = array<i32>} : memref<4x8x128xf32, #tpu.memory_space<vmem>>, vector<1x8x128xf32>,
    %c3_91 = arith.constant 3 : index
    %c0_92 = arith.constant 0 : index
    %c0_93 = arith.constant 0 : index
    %129 = vector.load %arg8[%c3_91, %c0_92, %c0_93] : memref<4x8x128xf32, #tpu.memory_space<vmem>>, vector<1x8x128xf32>
    %130 = vector.shape_cast %129 : vector<1x8x128xf32> to vector<8x128xf32>
    %131 = vector.shape_cast %119 : vector<40x128xf32> to vector<5x8x128xf32>
    %cst_94 = arith.constant dense<0.000000e+00> : vector<8x128xf32>
    %132 = vector.multi_reduction <add>, %131, %cst_94 [0] : vector<5x8x128xf32> to vector<8x128xf32>
    %133 = arith.addf %130, %132 : vector<8x128xf32>
    %c3_95 = arith.constant 3 : index
    %c0_96 = arith.constant 0 : index
    %c0_97 = arith.constant 0 : index
    %134 = vector.load %arg8[%c3_95, %c0_96, %c0_97] : memref<4x8x128xf32, #tpu.memory_space<vmem>>, vector<1x8x128xf32>
    %135 = vector.shape_cast %134 : vector<1x8x128xf32> to vector<8x128xf32>
    %136 = vector.shape_cast %133 : vector<8x128xf32> to vector<1x8x128xf32>
    tpu.vector_store %arg8[%c3_95, %c0_96, %c0_97], %136 {strides = array<i32>} : memref<4x8x128xf32, #tpu.memory_space<vmem>>, vector<1x8x128xf32>,
    %c0_i32_98 = arith.constant 0 : i32
    %137 = arith.cmpi eq, %arg0, %c0_i32_98 : i32
    %c0_i32_99 = arith.constant 0 : i32
    %138 = arith.cmpi eq, %arg0, %c0_i32_99 : i32
    %139 = arith.ori %137, %138 : i1
    %140 = arith.extui %139 : i1 to i32
    %c0_i32_100 = arith.constant 0 : i32
    %141 = arith.cmpi ne, %140, %c0_i32_100 : i32
    scf.if %141 {
      %c40_i32 = arith.constant 40 : i32
      %155 = arith.muli %arg0, %c40_i32 : i32
      %156 = vector.broadcast %155 : i32 to vector<40x128xi32>
      %157 = arith.addi %5, %156 : vector<40x128xi32>
      %c128_i32 = arith.constant 128 : i32
      %158 = vector.broadcast %c128_i32 : i32 to vector<40x128xi32>
      %159 = arith.muli %157, %158 : vector<40x128xi32>
      %160 = arith.addi %159, %6 : vector<40x128xi32>
      %c1_i32_110 = arith.constant 1 : i32
      %161 = vector.broadcast %c1_i32_110 : i32 to vector<40x128xi32>
      %162 = arith.cmpi sge, %160, %161 : vector<40x128xi32>
      %c4999_i32 = arith.constant 4999 : i32
      %163 = vector.broadcast %c4999_i32 : i32 to vector<40x128xi32>
      %164 = arith.cmpi sle, %160, %163 : vector<40x128xi32>
      %165 = arith.andi %162, %164 : vector<40x128xi1>
      %c2_i32 = arith.constant 2 : i32
      %166 = vector.broadcast %c2_i32 : i32 to vector<40x128xi32>
      %167 = arith.cmpi sge, %160, %166 : vector<40x128xi32>
      %c4999_i32_111 = arith.constant 4999 : i32
      %168 = vector.broadcast %c4999_i32_111 : i32 to vector<40x128xi32>
      %169 = arith.cmpi sle, %160, %168 : vector<40x128xi32>
      %170 = arith.andi %167, %169 : vector<40x128xi1>
      %cst_112 = arith.constant 0.000000e+00 : f32
      %171 = vector.broadcast %cst_112 : f32 to vector<40x128xf32>
      %172 = arith.select %165, %23, %171 : vector<40x128xi1>, vector<40x128xf32>
      %cst_113 = arith.constant 0.000000e+00 : f32
      %173 = vector.broadcast %cst_113 : f32 to vector<40x128xf32>
      %174 = arith.select %165, %32, %173 : vector<40x128xi1>, vector<40x128xf32>
      %175 = math.absf %172 : vector<40x128xf32>
      %176 = math.absf %41 : vector<40x128xf32>
      %cst_114 = arith.constant 0.000000e+00 : f32
      %177 = vector.broadcast %cst_114 : f32 to vector<40x128xf32>
      %178 = arith.select %170, %176, %177 : vector<40x128xi1>, vector<40x128xf32>
      %c2_115 = arith.constant 2 : index
      %c0_116 = arith.constant 0 : index
      %c0_117 = arith.constant 0 : index
      %179 = vector.load %arg6[%c2_115, %c0_116, %c0_117] : memref<8x8x128xf32, #tpu.memory_space<vmem>>, vector<1x8x128xf32>
      %180 = vector.shape_cast %179 : vector<1x8x128xf32> to vector<8x128xf32>
      %181 = vector.shape_cast %175 : vector<40x128xf32> to vector<5x8x128xf32>
      %cst_118 = arith.constant dense<0.000000e+00> : vector<8x128xf32>
      %182 = vector.multi_reduction <add>, %181, %cst_118 [0] : vector<5x8x128xf32> to vector<8x128xf32>
      %183 = arith.addf %180, %182 : vector<8x128xf32>
      %c2_119 = arith.constant 2 : index
      %c0_120 = arith.constant 0 : index
      %c0_121 = arith.constant 0 : index
      %184 = vector.load %arg6[%c2_119, %c0_120, %c0_121] : memref<8x8x128xf32, #tpu.memory_space<vmem>>, vector<1x8x128xf32>
      %185 = vector.shape_cast %184 : vector<1x8x128xf32> to vector<8x128xf32>
      %186 = vector.shape_cast %183 : vector<8x128xf32> to vector<1x8x128xf32>
      tpu.vector_store %arg6[%c2_119, %c0_120, %c0_121], %186 {strides = array<i32>} : memref<8x8x128xf32, #tpu.memory_space<vmem>>, vector<1x8x128xf32>,
      %c3_122 = arith.constant 3 : index
      %c0_123 = arith.constant 0 : index
      %c0_124 = arith.constant 0 : index
      %187 = vector.load %arg6[%c3_122, %c0_123, %c0_124] : memref<8x8x128xf32, #tpu.memory_space<vmem>>, vector<1x8x128xf32>
      %188 = vector.shape_cast %187 : vector<1x8x128xf32> to vector<8x128xf32>
      %189 = vector.shape_cast %172 : vector<40x128xf32> to vector<5x8x128xf32>
      %cst_125 = arith.constant dense<0.000000e+00> : vector<8x128xf32>
      %190 = vector.multi_reduction <add>, %189, %cst_125 [0] : vector<5x8x128xf32> to vector<8x128xf32>
      %191 = arith.addf %188, %190 : vector<8x128xf32>
      %c3_126 = arith.constant 3 : index
      %c0_127 = arith.constant 0 : index
      %c0_128 = arith.constant 0 : index
      %192 = vector.load %arg6[%c3_126, %c0_127, %c0_128] : memref<8x8x128xf32, #tpu.memory_space<vmem>>, vector<1x8x128xf32>
      %193 = vector.shape_cast %192 : vector<1x8x128xf32> to vector<8x128xf32>
      %194 = vector.shape_cast %191 : vector<8x128xf32> to vector<1x8x128xf32>
      tpu.vector_store %arg6[%c3_126, %c0_127, %c0_128], %194 {strides = array<i32>} : memref<8x8x128xf32, #tpu.memory_space<vmem>>, vector<1x8x128xf32>,
      %c4 = arith.constant 4 : index
      %c0_129 = arith.constant 0 : index
      %c0_130 = arith.constant 0 : index
      %195 = vector.load %arg6[%c4, %c0_129, %c0_130] : memref<8x8x128xf32, #tpu.memory_space<vmem>>, vector<1x8x128xf32>
      %196 = vector.shape_cast %195 : vector<1x8x128xf32> to vector<8x128xf32>
      %197 = arith.mulf %172, %172 : vector<40x128xf32>
      %198 = vector.shape_cast %197 : vector<40x128xf32> to vector<5x8x128xf32>
      %cst_131 = arith.constant dense<0.000000e+00> : vector<8x128xf32>
      %199 = vector.multi_reduction <add>, %198, %cst_131 [0] : vector<5x8x128xf32> to vector<8x128xf32>
      %200 = arith.addf %196, %199 : vector<8x128xf32>
      %c4_132 = arith.constant 4 : index
      %c0_133 = arith.constant 0 : index
      %c0_134 = arith.constant 0 : index
      %201 = vector.load %arg6[%c4_132, %c0_133, %c0_134] : memref<8x8x128xf32, #tpu.memory_space<vmem>>, vector<1x8x128xf32>
      %202 = vector.shape_cast %201 : vector<1x8x128xf32> to vector<8x128xf32>
      %203 = vector.shape_cast %200 : vector<8x128xf32> to vector<1x8x128xf32>
      tpu.vector_store %arg6[%c4_132, %c0_133, %c0_134], %203 {strides = array<i32>} : memref<8x8x128xf32, #tpu.memory_space<vmem>>, vector<1x8x128xf32>,
      %c5 = arith.constant 5 : index
      %c0_135 = arith.constant 0 : index
      %c0_136 = arith.constant 0 : index
      %204 = vector.load %arg6[%c5, %c0_135, %c0_136] : memref<8x8x128xf32, #tpu.memory_space<vmem>>, vector<1x8x128xf32>
      %205 = vector.shape_cast %204 : vector<1x8x128xf32> to vector<8x128xf32>
      %206 = vector.shape_cast %174 : vector<40x128xf32> to vector<5x8x128xf32>
      %cst_137 = arith.constant dense<0.000000e+00> : vector<8x128xf32>
      %207 = vector.multi_reduction <add>, %206, %cst_137 [0] : vector<5x8x128xf32> to vector<8x128xf32>
      %208 = arith.addf %205, %207 : vector<8x128xf32>
      %c5_138 = arith.constant 5 : index
      %c0_139 = arith.constant 0 : index
      %c0_140 = arith.constant 0 : index
      %209 = vector.load %arg6[%c5_138, %c0_139, %c0_140] : memref<8x8x128xf32, #tpu.memory_space<vmem>>, vector<1x8x128xf32>
      %210 = vector.shape_cast %209 : vector<1x8x128xf32> to vector<8x128xf32>
      %211 = vector.shape_cast %208 : vector<8x128xf32> to vector<1x8x128xf32>
      tpu.vector_store %arg6[%c5_138, %c0_139, %c0_140], %211 {strides = array<i32>} : memref<8x8x128xf32, #tpu.memory_space<vmem>>, vector<1x8x128xf32>,
      %c6 = arith.constant 6 : index
      %c0_141 = arith.constant 0 : index
      %c0_142 = arith.constant 0 : index
      %212 = vector.load %arg6[%c6, %c0_141, %c0_142] : memref<8x8x128xf32, #tpu.memory_space<vmem>>, vector<1x8x128xf32>
      %213 = vector.shape_cast %212 : vector<1x8x128xf32> to vector<8x128xf32>
      %214 = arith.mulf %174, %174 : vector<40x128xf32>
      %215 = vector.shape_cast %214 : vector<40x128xf32> to vector<5x8x128xf32>
      %cst_143 = arith.constant dense<0.000000e+00> : vector<8x128xf32>
      %216 = vector.multi_reduction <add>, %215, %cst_143 [0] : vector<5x8x128xf32> to vector<8x128xf32>
      %217 = arith.addf %213, %216 : vector<8x128xf32>
      %c6_144 = arith.constant 6 : index
      %c0_145 = arith.constant 0 : index
      %c0_146 = arith.constant 0 : index
      %218 = vector.load %arg6[%c6_144, %c0_145, %c0_146] : memref<8x8x128xf32, #tpu.memory_space<vmem>>, vector<1x8x128xf32>
      %219 = vector.shape_cast %218 : vector<1x8x128xf32> to vector<8x128xf32>
      %220 = vector.shape_cast %217 : vector<8x128xf32> to vector<1x8x128xf32>
      tpu.vector_store %arg6[%c6_144, %c0_145, %c0_146], %220 {strides = array<i32>} : memref<8x8x128xf32, #tpu.memory_space<vmem>>, vector<1x8x128xf32>,
      %c7 = arith.constant 7 : index
      %c0_147 = arith.constant 0 : index
      %c0_148 = arith.constant 0 : index
      %221 = vector.load %arg6[%c7, %c0_147, %c0_148] : memref<8x8x128xf32, #tpu.memory_space<vmem>>, vector<1x8x128xf32>
      %222 = vector.shape_cast %221 : vector<1x8x128xf32> to vector<8x128xf32>
      %223 = vector.shape_cast %178 : vector<40x128xf32> to vector<5x8x128xf32>
      %cst_149 = arith.constant dense<0.000000e+00> : vector<8x128xf32>
      %224 = vector.multi_reduction <add>, %223, %cst_149 [0] : vector<5x8x128xf32> to vector<8x128xf32>
      %225 = arith.addf %222, %224 : vector<8x128xf32>
      %c7_150 = arith.constant 7 : index
      %c0_151 = arith.constant 0 : index
      %c0_152 = arith.constant 0 : index
      %226 = vector.load %arg6[%c7_150, %c0_151, %c0_152] : memref<8x8x128xf32, #tpu.memory_space<vmem>>, vector<1x8x128xf32>
      %227 = vector.shape_cast %226 : vector<1x8x128xf32> to vector<8x128xf32>
      %228 = vector.shape_cast %225 : vector<8x128xf32> to vector<1x8x128xf32>
      tpu.vector_store %arg6[%c7_150, %c0_151, %c0_152], %228 {strides = array<i32>} : memref<8x8x128xf32, #tpu.memory_space<vmem>>, vector<1x8x128xf32>,
    } else {
    }
    %true = arith.constant true
    %142 = arith.xori %139, %true : i1
    %143 = arith.extui %142 : i1 to i32
    %c0_i32_101 = arith.constant 0 : i32
    %144 = arith.cmpi ne, %143, %c0_i32_101 : i32
    scf.if %144 {
      %155 = math.absf %23 : vector<40x128xf32>
      %156 = math.absf %41 : vector<40x128xf32>
      %c2_110 = arith.constant 2 : index
      %c0_111 = arith.constant 0 : index
      %c0_112 = arith.constant 0 : index
      %157 = vector.load %arg6[%c2_110, %c0_111, %c0_112] : memref<8x8x128xf32, #tpu.memory_space<vmem>>, vector<1x8x128xf32>
      %158 = vector.shape_cast %157 : vector<1x8x128xf32> to vector<8x128xf32>
      %159 = vector.shape_cast %155 : vector<40x128xf32> to vector<5x8x128xf32>
      %cst_113 = arith.constant dense<0.000000e+00> : vector<8x128xf32>
      %160 = vector.multi_reduction <add>, %159, %cst_113 [0] : vector<5x8x128xf32> to vector<8x128xf32>
      %161 = arith.addf %158, %160 : vector<8x128xf32>
      %c2_114 = arith.constant 2 : index
      %c0_115 = arith.constant 0 : index
      %c0_116 = arith.constant 0 : index
      %162 = vector.load %arg6[%c2_114, %c0_115, %c0_116] : memref<8x8x128xf32, #tpu.memory_space<vmem>>, vector<1x8x128xf32>
      %163 = vector.shape_cast %162 : vector<1x8x128xf32> to vector<8x128xf32>
      %164 = vector.shape_cast %161 : vector<8x128xf32> to vector<1x8x128xf32>
      tpu.vector_store %arg6[%c2_114, %c0_115, %c0_116], %164 {strides = array<i32>} : memref<8x8x128xf32, #tpu.memory_space<vmem>>, vector<1x8x128xf32>,
      %c3_117 = arith.constant 3 : index
      %c0_118 = arith.constant 0 : index
      %c0_119 = arith.constant 0 : index
      %165 = vector.load %arg6[%c3_117, %c0_118, %c0_119] : memref<8x8x128xf32, #tpu.memory_space<vmem>>, vector<1x8x128xf32>
      %166 = vector.shape_cast %165 : vector<1x8x128xf32> to vector<8x128xf32>
      %167 = vector.shape_cast %23 : vector<40x128xf32> to vector<5x8x128xf32>
      %cst_120 = arith.constant dense<0.000000e+00> : vector<8x128xf32>
      %168 = vector.multi_reduction <add>, %167, %cst_120 [0] : vector<5x8x128xf32> to vector<8x128xf32>
      %169 = arith.addf %166, %168 : vector<8x128xf32>
      %c3_121 = arith.constant 3 : index
      %c0_122 = arith.constant 0 : index
      %c0_123 = arith.constant 0 : index
      %170 = vector.load %arg6[%c3_121, %c0_122, %c0_123] : memref<8x8x128xf32, #tpu.memory_space<vmem>>, vector<1x8x128xf32>
      %171 = vector.shape_cast %170 : vector<1x8x128xf32> to vector<8x128xf32>
      %172 = vector.shape_cast %169 : vector<8x128xf32> to vector<1x8x128xf32>
      tpu.vector_store %arg6[%c3_121, %c0_122, %c0_123], %172 {strides = array<i32>} : memref<8x8x128xf32, #tpu.memory_space<vmem>>, vector<1x8x128xf32>,
      %c4 = arith.constant 4 : index
      %c0_124 = arith.constant 0 : index
      %c0_125 = arith.constant 0 : index
      %173 = vector.load %arg6[%c4, %c0_124, %c0_125] : memref<8x8x128xf32, #tpu.memory_space<vmem>>, vector<1x8x128xf32>
      %174 = vector.shape_cast %173 : vector<1x8x128xf32> to vector<8x128xf32>
      %175 = arith.mulf %23, %23 : vector<40x128xf32>
      %176 = vector.shape_cast %175 : vector<40x128xf32> to vector<5x8x128xf32>
      %cst_126 = arith.constant dense<0.000000e+00> : vector<8x128xf32>
      %177 = vector.multi_reduction <add>, %176, %cst_126 [0] : vector<5x8x128xf32> to vector<8x128xf32>
      %178 = arith.addf %174, %177 : vector<8x128xf32>
      %c4_127 = arith.constant 4 : index
      %c0_128 = arith.constant 0 : index
      %c0_129 = arith.constant 0 : index
      %179 = vector.load %arg6[%c4_127, %c0_128, %c0_129] : memref<8x8x128xf32, #tpu.memory_space<vmem>>, vector<1x8x128xf32>
      %180 = vector.shape_cast %179 : vector<1x8x128xf32> to vector<8x128xf32>
      %181 = vector.shape_cast %178 : vector<8x128xf32> to vector<1x8x128xf32>
      tpu.vector_store %arg6[%c4_127, %c0_128, %c0_129], %181 {strides = array<i32>} : memref<8x8x128xf32, #tpu.memory_space<vmem>>, vector<1x8x128xf32>,
      %c5 = arith.constant 5 : index
      %c0_130 = arith.constant 0 : index
      %c0_131 = arith.constant 0 : index
      %182 = vector.load %arg6[%c5, %c0_130, %c0_131] : memref<8x8x128xf32, #tpu.memory_space<vmem>>, vector<1x8x128xf32>
      %183 = vector.shape_cast %182 : vector<1x8x128xf32> to vector<8x128xf32>
      %184 = vector.shape_cast %32 : vector<40x128xf32> to vector<5x8x128xf32>
      %cst_132 = arith.constant dense<0.000000e+00> : vector<8x128xf32>
      %185 = vector.multi_reduction <add>, %184, %cst_132 [0] : vector<5x8x128xf32> to vector<8x128xf32>
      %186 = arith.addf %183, %185 : vector<8x128xf32>
      %c5_133 = arith.constant 5 : index
      %c0_134 = arith.constant 0 : index
      %c0_135 = arith.constant 0 : index
      %187 = vector.load %arg6[%c5_133, %c0_134, %c0_135] : memref<8x8x128xf32, #tpu.memory_space<vmem>>, vector<1x8x128xf32>
      %188 = vector.shape_cast %187 : vector<1x8x128xf32> to vector<8x128xf32>
      %189 = vector.shape_cast %186 : vector<8x128xf32> to vector<1x8x128xf32>
      tpu.vector_store %arg6[%c5_133, %c0_134, %c0_135], %189 {strides = array<i32>} : memref<8x8x128xf32, #tpu.memory_space<vmem>>, vector<1x8x128xf32>,
      %c6 = arith.constant 6 : index
      %c0_136 = arith.constant 0 : index
      %c0_137 = arith.constant 0 : index
      %190 = vector.load %arg6[%c6, %c0_136, %c0_137] : memref<8x8x128xf32, #tpu.memory_space<vmem>>, vector<1x8x128xf32>
      %191 = vector.shape_cast %190 : vector<1x8x128xf32> to vector<8x128xf32>
      %192 = arith.mulf %32, %32 : vector<40x128xf32>
      %193 = vector.shape_cast %192 : vector<40x128xf32> to vector<5x8x128xf32>
      %cst_138 = arith.constant dense<0.000000e+00> : vector<8x128xf32>
      %194 = vector.multi_reduction <add>, %193, %cst_138 [0] : vector<5x8x128xf32> to vector<8x128xf32>
      %195 = arith.addf %191, %194 : vector<8x128xf32>
      %c6_139 = arith.constant 6 : index
      %c0_140 = arith.constant 0 : index
      %c0_141 = arith.constant 0 : index
      %196 = vector.load %arg6[%c6_139, %c0_140, %c0_141] : memref<8x8x128xf32, #tpu.memory_space<vmem>>, vector<1x8x128xf32>
      %197 = vector.shape_cast %196 : vector<1x8x128xf32> to vector<8x128xf32>
      %198 = vector.shape_cast %195 : vector<8x128xf32> to vector<1x8x128xf32>
      tpu.vector_store %arg6[%c6_139, %c0_140, %c0_141], %198 {strides = array<i32>} : memref<8x8x128xf32, #tpu.memory_space<vmem>>, vector<1x8x128xf32>,
      %c7 = arith.constant 7 : index
      %c0_142 = arith.constant 0 : index
      %c0_143 = arith.constant 0 : index
      %199 = vector.load %arg6[%c7, %c0_142, %c0_143] : memref<8x8x128xf32, #tpu.memory_space<vmem>>, vector<1x8x128xf32>
      %200 = vector.shape_cast %199 : vector<1x8x128xf32> to vector<8x128xf32>
      %201 = vector.shape_cast %156 : vector<40x128xf32> to vector<5x8x128xf32>
      %cst_144 = arith.constant dense<0.000000e+00> : vector<8x128xf32>
      %202 = vector.multi_reduction <add>, %201, %cst_144 [0] : vector<5x8x128xf32> to vector<8x128xf32>
      %203 = arith.addf %200, %202 : vector<8x128xf32>
      %c7_145 = arith.constant 7 : index
      %c0_146 = arith.constant 0 : index
      %c0_147 = arith.constant 0 : index
      %204 = vector.load %arg6[%c7_145, %c0_146, %c0_147] : memref<8x8x128xf32, #tpu.memory_space<vmem>>, vector<1x8x128xf32>
      %205 = vector.shape_cast %204 : vector<1x8x128xf32> to vector<8x128xf32>
      %206 = vector.shape_cast %203 : vector<8x128xf32> to vector<1x8x128xf32>
      tpu.vector_store %arg6[%c7_145, %c0_146, %c0_147], %206 {strides = array<i32>} : memref<8x8x128xf32, #tpu.memory_space<vmem>>, vector<1x8x128xf32>,
    } else {
    }
    %145 = vector.extract_strided_slice %3 {offsets = [39, 127], sizes = [1, 1], strides = [1, 1]} : vector<40x128xf32> to vector<1x1xf32>
    %146 = vector.extract_strided_slice %3 {offsets = [39, 126], sizes = [1, 1], strides = [1, 1]} : vector<40x128xf32> to vector<1x1xf32>
    %c0_102 = arith.constant 0 : index
    %c0_103 = arith.constant 0 : index
    %147 = vector.load %arg9[%c0_102, %c0_103] : memref<8x128xf32, #tpu.memory_space<vmem>>, vector<1x1xf32>
    tpu.vector_store %arg9[%c0_102, %c0_103], %145 {strides = array<i32>} : memref<8x128xf32, #tpu.memory_space<vmem>>, vector<1x1xf32>,
    %148 = arith.subf %145, %146 : vector<1x1xf32>
    %c1_104 = arith.constant 1 : index
    %c0_105 = arith.constant 0 : index
    %149 = vector.load %arg9[%c1_104, %c0_105] : memref<8x128xf32, #tpu.memory_space<vmem>>, vector<1x1xf32>
    tpu.vector_store %arg9[%c1_104, %c0_105], %148 {strides = array<i32>} : memref<8x128xf32, #tpu.memory_space<vmem>>, vector<1x1xf32>,
    %150 = vector.extract_strided_slice %4 {offsets = [39, 127], sizes = [1, 1], strides = [1, 1]} : vector<40x128xf32> to vector<1x1xf32>
    %c2_106 = arith.constant 2 : index
    %c0_107 = arith.constant 0 : index
    %151 = vector.load %arg9[%c2_106, %c0_107] : memref<8x128xf32, #tpu.memory_space<vmem>>, vector<1x1xf32>
    tpu.vector_store %arg9[%c2_106, %c0_107], %150 {strides = array<i32>} : memref<8x128xf32, #tpu.memory_space<vmem>>, vector<1x1xf32>,
    %c0_i32_108 = arith.constant 0 : i32
    %152 = arith.cmpi eq, %arg0, %c0_i32_108 : i32
    %153 = arith.extui %152 : i1 to i32
    %c0_i32_109 = arith.constant 0 : i32
    %154 = arith.cmpi ne, %153, %c0_i32_109 : i32
    scf.if %154 {
      %c0_110 = arith.constant 0 : index
      %c0_111 = arith.constant 0 : index
      %c0_112 = arith.constant 0 : index
      %155 = vector.load %arg6[%c0_110, %c0_111, %c0_112] : memref<8x8x128xf32, #tpu.memory_space<vmem>>, vector<1x8x128xf32>
      %156 = vector.shape_cast %155 : vector<1x8x128xf32> to vector<8x128xf32>
      %157 = vector.shape_cast %156 : vector<8x128xf32> to vector<1x8x128xf32>
      %cst_113 = arith.constant dense<0.000000e+00> : vector<1xf32>
      %158 = vector.multi_reduction <add>, %157, %cst_113 [1, 2] : vector<1x8x128xf32> to vector<1xf32>
      %159 = vector.shape_cast %158 : vector<1xf32> to vector<1x1x1xf32>
      %160 = vector.extract %159[0, 0, 0] : f32 from vector<1x1x1xf32>
      %c1_114 = arith.constant 1 : index
      %c0_115 = arith.constant 0 : index
      %c0_116 = arith.constant 0 : index
      %161 = vector.load %arg6[%c1_114, %c0_115, %c0_116] : memref<8x8x128xf32, #tpu.memory_space<vmem>>, vector<1x8x128xf32>
      %162 = vector.shape_cast %161 : vector<1x8x128xf32> to vector<8x128xf32>
      %163 = vector.shape_cast %162 : vector<8x128xf32> to vector<1x8x128xf32>
      %cst_117 = arith.constant dense<0.000000e+00> : vector<1xf32>
      %164 = vector.multi_reduction <add>, %163, %cst_117 [1, 2] : vector<1x8x128xf32> to vector<1xf32>
      %165 = vector.shape_cast %164 : vector<1xf32> to vector<1x1x1xf32>
      %166 = vector.extract %165[0, 0, 0] : f32 from vector<1x1x1xf32>
      %c2_118 = arith.constant 2 : index
      %c0_119 = arith.constant 0 : index
      %c0_120 = arith.constant 0 : index
      %167 = vector.load %arg6[%c2_118, %c0_119, %c0_120] : memref<8x8x128xf32, #tpu.memory_space<vmem>>, vector<1x8x128xf32>
      %168 = vector.shape_cast %167 : vector<1x8x128xf32> to vector<8x128xf32>
      %169 = vector.shape_cast %168 : vector<8x128xf32> to vector<1x8x128xf32>
      %cst_121 = arith.constant dense<0.000000e+00> : vector<1xf32>
      %170 = vector.multi_reduction <add>, %169, %cst_121 [1, 2] : vector<1x8x128xf32> to vector<1xf32>
      %171 = vector.shape_cast %170 : vector<1xf32> to vector<1x1x1xf32>
      %172 = vector.extract %171[0, 0, 0] : f32 from vector<1x1x1xf32>
      %c3_122 = arith.constant 3 : index
      %c0_123 = arith.constant 0 : index
      %c0_124 = arith.constant 0 : index
      %173 = vector.load %arg6[%c3_122, %c0_123, %c0_124] : memref<8x8x128xf32, #tpu.memory_space<vmem>>, vector<1x8x128xf32>
      %174 = vector.shape_cast %173 : vector<1x8x128xf32> to vector<8x128xf32>
      %175 = vector.shape_cast %174 : vector<8x128xf32> to vector<1x8x128xf32>
      %cst_125 = arith.constant dense<0.000000e+00> : vector<1xf32>
      %176 = vector.multi_reduction <add>, %175, %cst_125 [1, 2] : vector<1x8x128xf32> to vector<1xf32>
      %177 = vector.shape_cast %176 : vector<1xf32> to vector<1x1x1xf32>
      %178 = vector.extract %177[0, 0, 0] : f32 from vector<1x1x1xf32>
      %c4 = arith.constant 4 : index
      %c0_126 = arith.constant 0 : index
      %c0_127 = arith.constant 0 : index
      %179 = vector.load %arg6[%c4, %c0_126, %c0_127] : memref<8x8x128xf32, #tpu.memory_space<vmem>>, vector<1x8x128xf32>
      %180 = vector.shape_cast %179 : vector<1x8x128xf32> to vector<8x128xf32>
      %181 = vector.shape_cast %180 : vector<8x128xf32> to vector<1x8x128xf32>
      %cst_128 = arith.constant dense<0.000000e+00> : vector<1xf32>
      %182 = vector.multi_reduction <add>, %181, %cst_128 [1, 2] : vector<1x8x128xf32> to vector<1xf32>
      %183 = vector.shape_cast %182 : vector<1xf32> to vector<1x1x1xf32>
      %184 = vector.extract %183[0, 0, 0] : f32 from vector<1x1x1xf32>
      %c5 = arith.constant 5 : index
      %c0_129 = arith.constant 0 : index
      %c0_130 = arith.constant 0 : index
      %185 = vector.load %arg6[%c5, %c0_129, %c0_130] : memref<8x8x128xf32, #tpu.memory_space<vmem>>, vector<1x8x128xf32>
      %186 = vector.shape_cast %185 : vector<1x8x128xf32> to vector<8x128xf32>
      %187 = vector.shape_cast %186 : vector<8x128xf32> to vector<1x8x128xf32>
      %cst_131 = arith.constant dense<0.000000e+00> : vector<1xf32>
      %188 = vector.multi_reduction <add>, %187, %cst_131 [1, 2] : vector<1x8x128xf32> to vector<1xf32>
      %189 = vector.shape_cast %188 : vector<1xf32> to vector<1x1x1xf32>
      %190 = vector.extract %189[0, 0, 0] : f32 from vector<1x1x1xf32>
      %c6 = arith.constant 6 : index
      %c0_132 = arith.constant 0 : index
      %c0_133 = arith.constant 0 : index
      %191 = vector.load %arg6[%c6, %c0_132, %c0_133] : memref<8x8x128xf32, #tpu.memory_space<vmem>>, vector<1x8x128xf32>
      %192 = vector.shape_cast %191 : vector<1x8x128xf32> to vector<8x128xf32>
      %193 = vector.shape_cast %192 : vector<8x128xf32> to vector<1x8x128xf32>
      %cst_134 = arith.constant dense<0.000000e+00> : vector<1xf32>
      %194 = vector.multi_reduction <add>, %193, %cst_134 [1, 2] : vector<1x8x128xf32> to vector<1xf32>
      %195 = vector.shape_cast %194 : vector<1xf32> to vector<1x1x1xf32>
      %196 = vector.extract %195[0, 0, 0] : f32 from vector<1x1x1xf32>
      %c7 = arith.constant 7 : index
      %c0_135 = arith.constant 0 : index
      %c0_136 = arith.constant 0 : index
      %197 = vector.load %arg6[%c7, %c0_135, %c0_136] : memref<8x8x128xf32, #tpu.memory_space<vmem>>, vector<1x8x128xf32>
      %198 = vector.shape_cast %197 : vector<1x8x128xf32> to vector<8x128xf32>
      %199 = vector.shape_cast %198 : vector<8x128xf32> to vector<1x8x128xf32>
      %cst_137 = arith.constant dense<0.000000e+00> : vector<1xf32>
      %200 = vector.multi_reduction <add>, %199, %cst_137 [1, 2] : vector<1x8x128xf32> to vector<1xf32>
      %201 = vector.shape_cast %200 : vector<1xf32> to vector<1x1x1xf32>
      %202 = vector.extract %201[0, 0, 0] : f32 from vector<1x1x1xf32>
      %cst_138 = arith.constant 2.000000e-04 : f32
      %203 = arith.mulf %160, %cst_138 : f32
      %cst_139 = arith.constant 4.999000e+03 : f32
      %204 = arith.divf %172, %cst_139 : f32
      %205 = arith.mulf %178, %178 : f32
      %cst_140 = arith.constant 4.999000e+03 : f32
      %206 = arith.divf %205, %cst_140 : f32
      %207 = arith.subf %184, %206 : f32
      %cst_141 = arith.constant 4.998000e+03 : f32
      %208 = arith.divf %207, %cst_141 : f32
      %209 = arith.mulf %190, %190 : f32
      %cst_142 = arith.constant 4.999000e+03 : f32
      %210 = arith.divf %209, %cst_142 : f32
      %211 = arith.subf %196, %210 : f32
      %cst_143 = arith.constant 4.998000e+03 : f32
      %212 = arith.divf %211, %cst_143 : f32
      %cst_144 = arith.constant 0.000000e+00 : f32
      %213 = arith.maximumf %208, %cst_144 : f32
      %214 = math.sqrt %213 : f32
      %cst_145 = arith.constant 0.000000e+00 : f32
      %215 = arith.maximumf %212, %cst_145 : f32
      %216 = math.sqrt %215 : f32
      %217 = arith.subf %214, %216 : f32
      %218 = math.absf %217 : f32
      %cst_146 = arith.constant 4.998000e+03 : f32
      %219 = arith.divf %202, %cst_146 : f32
      %220 = tpu.iota {dimensions = array<i32: 1>} : vector<1x128xi32>
      %cst_147 = arith.constant 0.000000e+00 : f32
      %221 = vector.broadcast %cst_147 : f32 to vector<1x128xf32>
      %c0_148 = arith.constant 0 : index
      %c0_149 = arith.constant 0 : index
      %c0_150 = arith.constant 0 : index
      %222 = vector.load %arg7[%c0_148, %c0_149, %c0_150] : memref<4x8x128xf32, #tpu.memory_space<vmem>>, vector<1x8x128xf32>
      %223 = vector.shape_cast %222 : vector<1x8x128xf32> to vector<8x128xf32>
      %224 = vector.shape_cast %223 : vector<8x128xf32> to vector<1x8x128xf32>
      %cst_151 = arith.constant dense<0.000000e+00> : vector<1xf32>
      %225 = vector.multi_reduction <add>, %224, %cst_151 [1, 2] : vector<1x8x128xf32> to vector<1xf32>
      %226 = vector.shape_cast %225 : vector<1xf32> to vector<1x1x1xf32>
      %227 = vector.extract %226[0, 0, 0] : f32 from vector<1x1x1xf32>
      %c0_152 = arith.constant 0 : index
      %c0_153 = arith.constant 0 : index
      %c0_154 = arith.constant 0 : index
      %228 = vector.load %arg8[%c0_152, %c0_153, %c0_154] : memref<4x8x128xf32, #tpu.memory_space<vmem>>, vector<1x8x128xf32>
      %229 = vector.shape_cast %228 : vector<1x8x128xf32> to vector<8x128xf32>
      %230 = vector.shape_cast %229 : vector<8x128xf32> to vector<1x8x128xf32>
      %cst_155 = arith.constant dense<0.000000e+00> : vector<1xf32>
      %231 = vector.multi_reduction <add>, %230, %cst_155 [1, 2] : vector<1x8x128xf32> to vector<1xf32>
      %232 = vector.shape_cast %231 : vector<1xf32> to vector<1x1x1xf32>
      %233 = vector.extract %232[0, 0, 0] : f32 from vector<1x1x1xf32>
      %234 = arith.mulf %233, %166 : f32
      %cst_156 = arith.constant 2.000000e-04 : f32
      %235 = arith.mulf %234, %cst_156 : f32
      %236 = arith.subf %227, %235 : f32
      %cst_157 = arith.constant 2.000000e-04 : f32
      %237 = arith.mulf %236, %cst_157 : f32
      %238 = math.absf %237 : f32
      %c1_i32_158 = arith.constant 1 : i32
      %239 = vector.broadcast %c1_i32_158 : i32 to vector<1x128xi32>
      %240 = arith.cmpi eq, %220, %239 : vector<1x128xi32>
      %241 = vector.broadcast %238 : f32 to vector<1x128xf32>
      %242 = arith.select %240, %241, %221 : vector<1x128xi1>, vector<1x128xf32>
      %c1_159 = arith.constant 1 : index
      %c0_160 = arith.constant 0 : index
      %c0_161 = arith.constant 0 : index
      %243 = vector.load %arg7[%c1_159, %c0_160, %c0_161] : memref<4x8x128xf32, #tpu.memory_space<vmem>>, vector<1x8x128xf32>
      %244 = vector.shape_cast %243 : vector<1x8x128xf32> to vector<8x128xf32>
      %245 = vector.shape_cast %244 : vector<8x128xf32> to vector<1x8x128xf32>
      %cst_162 = arith.constant dense<0.000000e+00> : vector<1xf32>
      %246 = vector.multi_reduction <add>, %245, %cst_162 [1, 2] : vector<1x8x128xf32> to vector<1xf32>
      %247 = vector.shape_cast %246 : vector<1xf32> to vector<1x1x1xf32>
      %248 = vector.extract %247[0, 0, 0] : f32 from vector<1x1x1xf32>
      %c1_163 = arith.constant 1 : index
      %c0_164 = arith.constant 0 : index
      %c0_165 = arith.constant 0 : index
      %249 = vector.load %arg8[%c1_163, %c0_164, %c0_165] : memref<4x8x128xf32, #tpu.memory_space<vmem>>, vector<1x8x128xf32>
      %250 = vector.shape_cast %249 : vector<1x8x128xf32> to vector<8x128xf32>
      %251 = vector.shape_cast %250 : vector<8x128xf32> to vector<1x8x128xf32>
      %cst_166 = arith.constant dense<0.000000e+00> : vector<1xf32>
      %252 = vector.multi_reduction <add>, %251, %cst_166 [1, 2] : vector<1x8x128xf32> to vector<1xf32>
      %253 = vector.shape_cast %252 : vector<1xf32> to vector<1x1x1xf32>
      %254 = vector.extract %253[0, 0, 0] : f32 from vector<1x1x1xf32>
      %255 = arith.mulf %254, %166 : f32
      %cst_167 = arith.constant 2.000000e-04 : f32
      %256 = arith.mulf %255, %cst_167 : f32
      %257 = arith.subf %248, %256 : f32
      %cst_168 = arith.constant 2.000000e-04 : f32
      %258 = arith.mulf %257, %cst_168 : f32
      %259 = math.absf %258 : f32
      %c2_i32 = arith.constant 2 : i32
      %260 = vector.broadcast %c2_i32 : i32 to vector<1x128xi32>
      %261 = arith.cmpi eq, %220, %260 : vector<1x128xi32>
      %262 = vector.broadcast %259 : f32 to vector<1x128xf32>
      %263 = arith.select %261, %262, %242 : vector<1x128xi1>, vector<1x128xf32>
      %c2_169 = arith.constant 2 : index
      %c0_170 = arith.constant 0 : index
      %c0_171 = arith.constant 0 : index
      %264 = vector.load %arg7[%c2_169, %c0_170, %c0_171] : memref<4x8x128xf32, #tpu.memory_space<vmem>>, vector<1x8x128xf32>
      %265 = vector.shape_cast %264 : vector<1x8x128xf32> to vector<8x128xf32>
      %266 = vector.shape_cast %265 : vector<8x128xf32> to vector<1x8x128xf32>
      %cst_172 = arith.constant dense<0.000000e+00> : vector<1xf32>
      %267 = vector.multi_reduction <add>, %266, %cst_172 [1, 2] : vector<1x8x128xf32> to vector<1xf32>
      %268 = vector.shape_cast %267 : vector<1xf32> to vector<1x1x1xf32>
      %269 = vector.extract %268[0, 0, 0] : f32 from vector<1x1x1xf32>
      %c2_173 = arith.constant 2 : index
      %c0_174 = arith.constant 0 : index
      %c0_175 = arith.constant 0 : index
      %270 = vector.load %arg8[%c2_173, %c0_174, %c0_175] : memref<4x8x128xf32, #tpu.memory_space<vmem>>, vector<1x8x128xf32>
      %271 = vector.shape_cast %270 : vector<1x8x128xf32> to vector<8x128xf32>
      %272 = vector.shape_cast %271 : vector<8x128xf32> to vector<1x8x128xf32>
      %cst_176 = arith.constant dense<0.000000e+00> : vector<1xf32>
      %273 = vector.multi_reduction <add>, %272, %cst_176 [1, 2] : vector<1x8x128xf32> to vector<1xf32>
      %274 = vector.shape_cast %273 : vector<1xf32> to vector<1x1x1xf32>
      %275 = vector.extract %274[0, 0, 0] : f32 from vector<1x1x1xf32>
      %276 = arith.mulf %275, %166 : f32
      %cst_177 = arith.constant 2.000000e-04 : f32
      %277 = arith.mulf %276, %cst_177 : f32
      %278 = arith.subf %269, %277 : f32
      %cst_178 = arith.constant 2.000000e-04 : f32
      %279 = arith.mulf %278, %cst_178 : f32
      %280 = math.absf %279 : f32
      %c3_i32 = arith.constant 3 : i32
      %281 = vector.broadcast %c3_i32 : i32 to vector<1x128xi32>
      %282 = arith.cmpi eq, %220, %281 : vector<1x128xi32>
      %283 = vector.broadcast %280 : f32 to vector<1x128xf32>
      %284 = arith.select %282, %283, %263 : vector<1x128xi1>, vector<1x128xf32>
      %c3_179 = arith.constant 3 : index
      %c0_180 = arith.constant 0 : index
      %c0_181 = arith.constant 0 : index
      %285 = vector.load %arg7[%c3_179, %c0_180, %c0_181] : memref<4x8x128xf32, #tpu.memory_space<vmem>>, vector<1x8x128xf32>
      %286 = vector.shape_cast %285 : vector<1x8x128xf32> to vector<8x128xf32>
      %287 = vector.shape_cast %286 : vector<8x128xf32> to vector<1x8x128xf32>
      %cst_182 = arith.constant dense<0.000000e+00> : vector<1xf32>
      %288 = vector.multi_reduction <add>, %287, %cst_182 [1, 2] : vector<1x8x128xf32> to vector<1xf32>
      %289 = vector.shape_cast %288 : vector<1xf32> to vector<1x1x1xf32>
      %290 = vector.extract %289[0, 0, 0] : f32 from vector<1x1x1xf32>
      %c3_183 = arith.constant 3 : index
      %c0_184 = arith.constant 0 : index
      %c0_185 = arith.constant 0 : index
      %291 = vector.load %arg8[%c3_183, %c0_184, %c0_185] : memref<4x8x128xf32, #tpu.memory_space<vmem>>, vector<1x8x128xf32>
      %292 = vector.shape_cast %291 : vector<1x8x128xf32> to vector<8x128xf32>
      %293 = vector.shape_cast %292 : vector<8x128xf32> to vector<1x8x128xf32>
      %cst_186 = arith.constant dense<0.000000e+00> : vector<1xf32>
      %294 = vector.multi_reduction <add>, %293, %cst_186 [1, 2] : vector<1x8x128xf32> to vector<1xf32>
      %295 = vector.shape_cast %294 : vector<1xf32> to vector<1x1x1xf32>
      %296 = vector.extract %295[0, 0, 0] : f32 from vector<1x1x1xf32>
      %297 = arith.mulf %296, %166 : f32
      %cst_187 = arith.constant 2.000000e-04 : f32
      %298 = arith.mulf %297, %cst_187 : f32
      %299 = arith.subf %290, %298 : f32
      %cst_188 = arith.constant 2.000000e-04 : f32
      %300 = arith.mulf %299, %cst_188 : f32
      %301 = math.absf %300 : f32
      %c4_i32 = arith.constant 4 : i32
      %302 = vector.broadcast %c4_i32 : i32 to vector<1x128xi32>
      %303 = arith.cmpi eq, %220, %302 : vector<1x128xi32>
      %304 = vector.broadcast %301 : f32 to vector<1x128xf32>
      %305 = arith.select %303, %304, %284 : vector<1x128xi1>, vector<1x128xf32>
      %c0_189 = arith.constant 0 : index
      %c0_190 = arith.constant 0 : index
      %306 = vector.load %arg4[%c0_189, %c0_190] : memref<1x128xf32, #tpu.memory_space<vmem>>, vector<1x128xf32>
      %307 = arith.mulf %306, %305 : vector<1x128xf32>
      %308 = vector.shape_cast %307 : vector<1x128xf32> to vector<1x1x128xf32>
      %cst_191 = arith.constant dense<0.000000e+00> : vector<1xf32>
      %309 = vector.multi_reduction <add>, %308, %cst_191 [1, 2] : vector<1x1x128xf32> to vector<1xf32>
      %310 = vector.shape_cast %309 : vector<1xf32> to vector<1x1x1xf32>
      %311 = vector.extract %310[0, 0, 0] : f32 from vector<1x1x1xf32>
      %312 = arith.addf %203, %311 : f32
      %cst_192 = arith.constant 5.000000e-03 : f32
      %313 = arith.mulf %cst_192, %204 : f32
      %314 = arith.addf %312, %313 : f32
      %cst_193 = arith.constant 2.000000e-03 : f32
      %315 = arith.mulf %cst_193, %218 : f32
      %316 = arith.addf %314, %315 : f32
      %cst_194 = arith.constant 1.000000e-03 : f32
      %317 = arith.mulf %cst_194, %219 : f32
      %318 = arith.addf %316, %317 : f32
      %c0_i32_195 = arith.constant 0 : i32
      %319 = vector.broadcast %c0_i32_195 : i32 to vector<1x128xi32>
      %320 = arith.cmpi eq, %220, %319 : vector<1x128xi32>
      %321 = vector.broadcast %318 : f32 to vector<1x128xf32>
      %322 = arith.select %320, %321, %305 : vector<1x128xi1>, vector<1x128xf32>
      %c5_i32 = arith.constant 5 : i32
      %323 = vector.broadcast %c5_i32 : i32 to vector<1x128xi32>
      %324 = arith.cmpi eq, %220, %323 : vector<1x128xi32>
      %325 = vector.broadcast %204 : f32 to vector<1x128xf32>
      %326 = arith.select %324, %325, %322 : vector<1x128xi1>, vector<1x128xf32>
      %c6_i32 = arith.constant 6 : i32
      %327 = vector.broadcast %c6_i32 : i32 to vector<1x128xi32>
      %328 = arith.cmpi eq, %220, %327 : vector<1x128xi32>
      %329 = vector.broadcast %218 : f32 to vector<1x128xf32>
      %330 = arith.select %328, %329, %326 : vector<1x128xi1>, vector<1x128xf32>
      %c7_i32 = arith.constant 7 : i32
      %331 = vector.broadcast %c7_i32 : i32 to vector<1x128xi32>
      %332 = arith.cmpi eq, %220, %331 : vector<1x128xi32>
      %333 = vector.broadcast %219 : f32 to vector<1x128xf32>
      %334 = arith.select %332, %333, %330 : vector<1x128xi1>, vector<1x128xf32>
      %c0_196 = arith.constant 0 : index
      %c0_197 = arith.constant 0 : index
      %335 = vector.load %arg5[%c0_196, %c0_197] : memref<1x128xf32, #tpu.memory_space<vmem>>, vector<1x128xf32>
      tpu.vector_store %arg5[%c0_196, %c0_197], %334 {strides = array<i32>} : memref<1x128xf32, #tpu.memory_space<vmem>>, vector<1x128xf32>,
    } else {
    }
    return
  }
  func.func @transform_0(%arg0: i32) -> (i32, i32) {
    %c0_i32 = arith.constant 0 : i32
    %c0_i32_0 = arith.constant 0 : i32
    return %arg0, %c0_i32 : i32, i32
  }
  func.func @transform_1(%arg0: i32) -> (i32, i32) {
    %c0_i32 = arith.constant 0 : i32
    %c0_i32_0 = arith.constant 0 : i32
    return %arg0, %c0_i32 : i32, i32
  }
  func.func @transform_2(%arg0: i32) -> (i32, i32, i32) {
    %c0_i32 = arith.constant 0 : i32
    %c0_i32_0 = arith.constant 0 : i32
    %c0_i32_1 = arith.constant 0 : i32
    return %c0_i32, %arg0, %c0_i32_0 : i32, i32, i32
  }
  func.func @transform_3(%arg0: i32) -> (i32, i32) {
    %c0_i32 = arith.constant 0 : i32
    %c0_i32_0 = arith.constant 0 : i32
    %c0_i32_1 = arith.constant 0 : i32
    return %c0_i32, %c0_i32_0 : i32, i32
  }
  func.func @transform_4(%arg0: i32) -> (i32, i32) {
    %c0_i32 = arith.constant 0 : i32
    %c0_i32_0 = arith.constant 0 : i32
    %c0_i32_1 = arith.constant 0 : i32
    return %c0_i32, %c0_i32_0 : i32, i32
  }
}

</mosaic_0001>

<llo_original>
// kernel: _adaptive_loss_pallas.1
$region0: #{_adaptive_loss_pallas.1}
  #allocation0 [shape = 'u32[]', space=smem, size = 0x4, offset = 0x4, fixed_abs, tag = 'smem constant byte address 0x4 - core index']
  #allocation1 [shape = 'u32[72,128]{1,0:T(1,128)}', space=vmem, size = 0x9000, scoped, tag = 'internal scratch']
  #allocation2 [shape = 'f32[8,8,128]{2,1,0:T(8,128)}', space=vmem, size = 0x8000, scoped, tag = 'scratch operand']
  #allocation3 [shape = 'f32[4,8,128]{2,1,0:T(8,128)}', space=vmem, size = 0x4000, scoped, tag = 'scratch operand']
  #allocation4 [shape = 'f32[4,8,128]{2,1,0:T(8,128)}', space=vmem, size = 0x4000, scoped, tag = 'scratch operand']
  #allocation5 [shape = 'f32[8,128]{1,0:T(8,128)}', space=vmem, size = 0x1000, scoped, tag = 'scratch operand']
  %s0 = inlined_call_operand.vmem [shape: f32[40,128], index: 0, kind: input, shape index: {}]
  %s1 = inlined_call_operand.vmem [shape: f32[40,128], index: 1, kind: input, shape index: {}]
  %s2 = inlined_call_operand.vmem [shape: f32[4,40,128], index: 2, kind: input, shape index: {}]
  %s3 = inlined_call_operand.vmem [shape: f32[1,128], index: 3, kind: input, shape index: {}]
  %s4 = inlined_call_operand.hbm [shape: f32[1,128], index: 4, kind: output, shape index: {}]
  %s5 = sld [smem:[#allocation0]]
  $region42: #{_adaptive_loss_pallas.1} parent=0
    _
  %s7 = ssub.s32 1, %s5
  %s8 = scalar_select 0, %s7, %s5
  $region1: #{_adaptive_loss_pallas.1} parent=0
    #allocation6 [shape = 'u8[512]{0}', space=vmem, size = 0x400, scoped, tag = 'output window, operand 0, single buffered']
    #allocation7 [shape = 's32[1]{0}', space=sflag, size = 0x4, scoped, tag = 'scoped memory for _adaptive_loss_pallas.1']
    %9 = vsyncpa [#allocation7], 0
    // Predicated region
    $region2: #{_adaptive_loss_pallas.1} parent=1 // pred_check
      _
    $region3: #{_adaptive_loss_pallas.1} parent=1 // pred_check_branch
      %11 = sbr.rel (0) target = $region5
    $region4: #{_adaptive_loss_pallas.1} parent=1 // pred_region
      _
    $region5: #{_adaptive_loss_pallas.1} parent=1 // pred_fallthru
      _
    // Predicated region
    $region6: #{_adaptive_loss_pallas.1} parent=1 // pred_check
      _
    $region7: #{_adaptive_loss_pallas.1} parent=1 // pred_check_branch
      %13 = sbr.rel (0) target = $region9
    $region8: #{_adaptive_loss_pallas.1} parent=1 // pred_region
      _
    $region9: #{_adaptive_loss_pallas.1} parent=1 // pred_fallthru
      _
    // Predicated region
    $region10: #{_adaptive_loss_pallas.1} parent=1 // pred_check
      _
    $region11: #{_adaptive_loss_pallas.1} parent=1 // pred_check_branch
      %15 = sbr.rel (0) target = $region13
    $region12: #{_adaptive_loss_pallas.1} parent=1 // pred_region
      _
    $region13: #{_adaptive_loss_pallas.1} parent=1 // pred_fallthru
      _
    // Predicated region
    $region14: #{_adaptive_loss_pallas.1} parent=1 // pred_check
      _
    $region15: #{_adaptive_loss_pallas.1} parent=1 // pred_check_branch
      %17 = sbr.rel (0) target = $region17
    $region16: #{_adaptive_loss_pallas.1} parent=1 // pred_region
      _
    $region17: #{_adaptive_loss_pallas.1} parent=1 // pred_fallthru
      _
    %p18 = scmp.eq.s32.totalorder 0, 0
    // Predicated region
    $region18: #{_adaptive_loss_pallas.1} parent=1 // pred_check
      %p19 = pneg %p18
    $region19: #{_adaptive_loss_pallas.1} parent=1 // pred_check_branch
      %21 = sbr.rel (%p19) target = $region21
    $region20: #{_adaptive_loss_pallas.1} parent=1 // pred_region
      %22 = vst [vmem:[#allocation2] sm:$0xff] 0.0
      %23 = vst [vmem:[#allocation2 + $0x8] sm:$0xff] 0.0
      %24 = vst [vmem:[#allocation2 + $0x10] sm:$0xff] 0.0
      %25 = vst [vmem:[#allocation2 + $0x18] sm:$0xff] 0.0
      %26 = vst [vmem:[#allocation2 + $0x20] sm:$0xff] 0.0
      %27 = vst [vmem:[#allocation2 + $0x28] sm:$0xff] 0.0
      %28 = vst [vmem:[#allocation2 + $0x30] sm:$0xff] 0.0
      %29 = vst [vmem:[#allocation2 + $0x38] sm:$0xff] 0.0
      %30 = vst [vmem:[#allocation3] sm:$0xff] 0.0
      %31 = vst [vmem:[#allocation3 + $0x8] sm:$0xff] 0.0
      %32 = vst [vmem:[#allocation3 + $0x10] sm:$0xff] 0.0
      %33 = vst [vmem:[#allocation3 + $0x18] sm:$0xff] 0.0
      %34 = vst [vmem:[#allocation4] sm:$0xff] 0.0
      %35 = vst [vmem:[#allocation4 + $0x8] sm:$0xff] 0.0
      %36 = vst [vmem:[#allocation4 + $0x10] sm:$0xff] 0.0
      %37 = vst [vmem:[#allocation4 + $0x18] sm:$0xff] 0.0
      %38 = vst [vmem:[#allocation5] sm:$0xff] 0.0
    $region21: #{_adaptive_loss_pallas.1} parent=1 // pred_fallthru
      _
    %v39 = vld [vmem:[%s0] sm:$0xff]
    %v40 = vld [vmem:[%s0 + $0x8] sm:$0xff]
    %v41 = vld [vmem:[%s0 + $0x10] sm:$0xff]
    %v42 = vld [vmem:[%s0 + $0x18] sm:$0xff]
    %v43 = vld [vmem:[%s0 + $0x20] sm:$0xff]
    %v44 = vld [vmem:[%s1] sm:$0xff]
    %v45 = vld [vmem:[%s1 + $0x8] sm:$0xff]
    %v46 = vld [vmem:[%s1 + $0x10] sm:$0xff]
    %v47 = vld [vmem:[%s1 + $0x18] sm:$0xff]
    %v48 = vld [vmem:[%s1 + $0x20] sm:$0xff]
    %v49 = vlaneseq
    %v50 = vshrl.u32 %v49, 7
    %v51 = vadd.s32 %v50, 8
    %v52 = vadd.s32 %v50, 16
    %v53 = vadd.s32 %v50, 24
    %v54 = vadd.s32 %v50, 32
    %v55 = vlaneseq
    %v56 = vand.u32 %v55, 127
    %vm57 = vcmp.eq.s32.totalorder %v50, 0
    %vm58 = vcmp.eq.s32.totalorder %v51, 0
    %vm59 = vcmp.eq.s32.totalorder %v52, 0
    %vm60 = vcmp.eq.s32.totalorder %v53, 0
    %vm61 = vcmp.eq.s32.totalorder %v54, 0
    %vm62 = vcmp.eq.s32.totalorder %v56, 0
    %vm63 = vmand %vm57, %vm62
    %vm64 = vmand %vm58, %vm62
    %vm65 = vmand %vm59, %vm62
    %vm66 = vmand %vm60, %vm62
    %vm67 = vmand %vm61, %vm62
    %v68 = vld [vmem:[#allocation5] sm:$0x1]
    %v69 = vld [vmem:[#allocation5 + $0x1] sm:$0x1]
    %v70 = vld [vmem:[#allocation5 + $0x2] sm:$0x1]
    %71 = vrot.lane.b32.xlu0 %v39, 1
    %v72 = vpop.permute.xlu0 %71
    %73 = vrot.lane.b32.xlu0 %v40, 1
    %v74 = vpop.permute.xlu0 %73
    %75 = vrot.lane.b32.xlu0 %v41, 1
    %v76 = vpop.permute.xlu0 %75
    %77 = vrot.lane.b32.xlu0 %v42, 1
    %v78 = vpop.permute.xlu0 %77
    %79 = vrot.lane.b32.xlu0 %v43, 1
    %v80 = vpop.permute.xlu0 %79
    %v81 = vrot.slane %v72, 7
    %v82 = vrot.slane %v74, 7
    %v83 = vrot.slane %v76, 7
    %v84 = vrot.slane %v78, 7
    %v85 = vrot.slane %v80, 7
    %vm86 = vcmp.lt.s32.totalorder %v50, 1
    %v87 = vsel %vm86, %v84, %v85
    %v88 = vsel %vm86, %v83, %v84
    %v89 = vsel %vm86, %v82, %v83
    %v90 = vsel %vm86, %v81, %v82
    %v91 = vsel %vm86, %v85, %v81
    %v92 = vsel %vm62, %v91, %v72
    %v93 = vsel %vm62, %v90, %v74
    %v94 = vsel %vm62, %v89, %v76
    %v95 = vsel %vm62, %v88, %v78
    %v96 = vsel %vm62, %v87, %v80
    %s98 = vtos %v68
    %v99 = vstv %s98
    %v101 = vsel %vm63, %v99, %v92
    %v102 = vsel %vm64, %v99, %v93
    %v103 = vsel %vm65, %v99, %v94
    %v104 = vsel %vm66, %v99, %v95
    %v105 = vsel %vm67, %v99, %v96
    %v106 = vsub.f32 %v39, %v101
    %v107 = vsub.f32 %v40, %v102
    %v108 = vsub.f32 %v41, %v103
    %v109 = vsub.f32 %v42, %v104
    %v110 = vsub.f32 %v43, %v105
    %111 = vrot.lane.b32.xlu0 %v44, 1
    %v112 = vpop.permute.xlu0 %111
    %113 = vrot.lane.b32.xlu0 %v45, 1
    %v114 = vpop.permute.xlu0 %113
    %115 = vrot.lane.b32.xlu0 %v46, 1
    %v116 = vpop.permute.xlu0 %115
    %117 = vrot.lane.b32.xlu0 %v47, 1
    %v118 = vpop.permute.xlu0 %117
    %119 = vrot.lane.b32.xlu0 %v48, 1
    %v120 = vpop.permute.xlu0 %119
    %v121 = vrot.slane %v112, 7
    %v122 = vrot.slane %v114, 7
    %v123 = vrot.slane %v116, 7
    %v124 = vrot.slane %v118, 7
    %v125 = vrot.slane %v120, 7
    %v126 = vsel %vm86, %v124, %v125
    %v127 = vsel %vm86, %v123, %v124
    %v128 = vsel %vm86, %v122, %v123
    %v129 = vsel %vm86, %v121, %v122
    %v130 = vsel %vm86, %v125, %v121
    %v131 = vsel %vm62, %v130, %v112
    %v132 = vsel %vm62, %v129, %v114
    %v133 = vsel %vm62, %v128, %v116
    %v134 = vsel %vm62, %v127, %v118
    %v135 = vsel %vm62, %v126, %v120
    %s137 = vtos %v70
    %v138 = vstv %s137
    %v140 = vsel %vm63, %v138, %v131
    %v141 = vsel %vm64, %v138, %v132
    %v142 = vsel %vm65, %v138, %v133
    %v143 = vsel %vm66, %v138, %v134
    %v144 = vsel %vm67, %v138, %v135
    %v145 = vsub.f32 %v44, %v140
    %v146 = vsub.f32 %v45, %v141
    %v147 = vsub.f32 %v46, %v142
    %v148 = vsub.f32 %v47, %v143
    %v149 = vsub.f32 %v48, %v144
    %150 = vrot.lane.b32.xlu0 %v106, 1
    %v151 = vpop.permute.xlu0 %150
    %152 = vrot.lane.b32.xlu0 %v107, 1
    %v153 = vpop.permute.xlu0 %152
    %154 = vrot.lane.b32.xlu0 %v108, 1
    %v155 = vpop.permute.xlu0 %154
    %156 = vrot.lane.b32.xlu0 %v109, 1
    %v157 = vpop.permute.xlu0 %156
    %158 = vrot.lane.b32.xlu0 %v110, 1
    %v159 = vpop.permute.xlu0 %158
    %v160 = vrot.slane %v151, 7
    %v161 = vrot.slane %v153, 7
    %v162 = vrot.slane %v155, 7
    %v163 = vrot.slane %v157, 7
    %v164 = vrot.slane %v159, 7
    %v165 = vsel %vm86, %v163, %v164
    %v166 = vsel %vm86, %v162, %v163
    %v167 = vsel %vm86, %v161, %v162
    %v168 = vsel %vm86, %v160, %v161
    %v169 = vsel %vm86, %v164, %v160
    %v170 = vsel %vm62, %v169, %v151
    %v171 = vsel %vm62, %v168, %v153
    %v172 = vsel %vm62, %v167, %v155
    %v173 = vsel %vm62, %v166, %v157
    %v174 = vsel %vm62, %v165, %v159
    %s176 = vtos %v69
    %v177 = vstv %s176
    %v179 = vsel %vm63, %v177, %v170
    %v180 = vsel %vm64, %v177, %v171
    %v181 = vsel %vm65, %v177, %v172
    %v182 = vsel %vm66, %v177, %v173
    %v183 = vsel %vm67, %v177, %v174
    %v184 = vsub.f32 %v106, %v179
    %v185 = vsub.f32 %v107, %v180
    %v186 = vsub.f32 %v108, %v181
    %v187 = vsub.f32 %v109, %v182
    %v188 = vsub.f32 %v110, %v183
    %v189 = vld [vmem:[#allocation2] sm:$0xff]
    %v190 = vsub.f32 %v39, %v44
    %v191 = vsub.f32 %v40, %v45
    %v192 = vsub.f32 %v41, %v46
    %v193 = vsub.f32 %v42, %v47
    %v194 = vsub.f32 %v43, %v48
    %v195 = vmul.f32 %v190, %v190
    %v196 = vmul.f32 %v191, %v191
    %v197 = vmul.f32 %v192, %v192
    %v198 = vmul.f32 %v193, %v193
    %v199 = vmul.f32 %v194, %v194
    %v200 = vadd.f32 %v195, %v196
    %v201 = vadd.f32 %v200, %v197
    %v202 = vadd.f32 %v201, %v198
    %v203 = vadd.f32 %v202, %v199
    %v204 = vadd.f32 %v189, %v203
    %205 = vst [vmem:[#allocation2] sm:$0xff] %v204
    %s206 = scalar_lea.vmem [#allocation2], 8
    %v207 = vld [vmem:[%s206] sm:$0xff]
    %v208 = vadd.f32 %v44, %v45
    %v209 = vadd.f32 %v208, %v46
    %v210 = vadd.f32 %v209, %v47
    %v211 = vadd.f32 %v210, %v48
    %v212 = vadd.f32 %v207, %v211
    %213 = vst [vmem:[%s206] sm:$0xff] %v212
    %v214 = vld [vmem:[%s2] sm:$0xff]
    %v215 = vld [vmem:[%s2 + $0x8] sm:$0xff]
    %v216 = vld [vmem:[%s2 + $0x10] sm:$0xff]
    %v217 = vld [vmem:[%s2 + $0x18] sm:$0xff]
    %v218 = vld [vmem:[%s2 + $0x20] sm:$0xff]
    %v219 = vld [vmem:[#allocation3] sm:$0xff]
    %v220 = vmul.f32 %v214, %v44
    %v221 = vmul.f32 %v215, %v45
    %v222 = vmul.f32 %v216, %v46
    %v223 = vmul.f32 %v217, %v47
    %v224 = vmul.f32 %v218, %v48
    %v225 = vadd.f32 %v220, %v221
    %v226 = vadd.f32 %v225, %v222
    %v227 = vadd.f32 %v226, %v223
    %v228 = vadd.f32 %v227, %v224
    %v229 = vadd.f32 %v219, %v228
    %230 = vst [vmem:[#allocation3] sm:$0xff] %v229
    %v231 = vld [vmem:[#allocation4] sm:$0xff]
    %v232 = vadd.f32 %v214, %v215
    %v233 = vadd.f32 %v232, %v216
    %v234 = vadd.f32 %v233, %v217
    %v235 = vadd.f32 %v234, %v218
    %v236 = vadd.f32 %v231, %v235
    %237 = vst [vmem:[#allocation4] sm:$0xff] %v236
    %s238 = scalar_lea.vmem %s2, 40
    %v239 = vld [vmem:[%s238] sm:$0xff]
    %v240 = vld [vmem:[%s238 + $0x8] sm:$0xff]
    %v241 = vld [vmem:[%s238 + $0x10] sm:$0xff]
    %v242 = vld [vmem:[%s238 + $0x18] sm:$0xff]
    %v243 = vld [vmem:[%s238 + $0x20] sm:$0xff]
    %s244 = scalar_lea.vmem [#allocation3], 8
    %v245 = vld [vmem:[%s244] sm:$0xff]
    %v246 = vmul.f32 %v239, %v44
    %v247 = vmul.f32 %v240, %v45
    %v248 = vmul.f32 %v241, %v46
    %v249 = vmul.f32 %v242, %v47
    %v250 = vmul.f32 %v243, %v48
    %v251 = vadd.f32 %v246, %v247
    %v252 = vadd.f32 %v251, %v248
    %v253 = vadd.f32 %v252, %v249
    %v254 = vadd.f32 %v253, %v250
    %v255 = vadd.f32 %v245, %v254
    %256 = vst [vmem:[%s244] sm:$0xff] %v255
    %s257 = scalar_lea.vmem [#allocation4], 8
    %v258 = vld [vmem:[%s257] sm:$0xff]
    %v259 = vadd.f32 %v239, %v240
    %v260 = vadd.f32 %v259, %v241
    %v261 = vadd.f32 %v260, %v242
    %v262 = vadd.f32 %v261, %v243
    %v263 = vadd.f32 %v258, %v262
    %264 = vst [vmem:[%s257] sm:$0xff] %v263
    %s265 = scalar_lea.vmem %s2, 80
    %v266 = vld [vmem:[%s265] sm:$0xff]
    %v267 = vld [vmem:[%s265 + $0x8] sm:$0xff]
    %v268 = vld [vmem:[%s265 + $0x10] sm:$0xff]
    %v269 = vld [vmem:[%s265 + $0x18] sm:$0xff]
    %v270 = vld [vmem:[%s265 + $0x20] sm:$0xff]
    %s271 = scalar_lea.vmem [#allocation3], 16
    %v272 = vld [vmem:[%s271] sm:$0xff]
    %v273 = vmul.f32 %v266, %v44
    %v274 = vmul.f32 %v267, %v45
    %v275 = vmul.f32 %v268, %v46
    %v276 = vmul.f32 %v269, %v47
    %v277 = vmul.f32 %v270, %v48
    %v278 = vadd.f32 %v273, %v274
    %v279 = vadd.f32 %v278, %v275
    %v280 = vadd.f32 %v279, %v276
    %v281 = vadd.f32 %v280, %v277
    %v282 = vadd.f32 %v272, %v281
    %283 = vst [vmem:[%s271] sm:$0xff] %v282
    %s284 = scalar_lea.vmem [#allocation4], 16
    %v285 = vld [vmem:[%s284] sm:$0xff]
    %v286 = vadd.f32 %v266, %v267
    %v287 = vadd.f32 %v286, %v268
    %v288 = vadd.f32 %v287, %v269
    %v289 = vadd.f32 %v288, %v270
    %v290 = vadd.f32 %v285, %v289
    %291 = vst [vmem:[%s284] sm:$0xff] %v290
    %s292 = scalar_lea.vmem %s2, 120
    %v293 = vld [vmem:[%s292] sm:$0xff]
    %v294 = vld [vmem:[%s292 + $0x8] sm:$0xff]
    %v295 = vld [vmem:[%s292 + $0x10] sm:$0xff]
    %v296 = vld [vmem:[%s292 + $0x18] sm:$0xff]
    %v297 = vld [vmem:[%s292 + $0x20] sm:$0xff]
    %s298 = scalar_lea.vmem [#allocation3], 24
    %v299 = vld [vmem:[%s298] sm:$0xff]
    %v300 = vmul.f32 %v293, %v44
    %v301 = vmul.f32 %v294, %v45
    %v302 = vmul.f32 %v295, %v46
    %v303 = vmul.f32 %v296, %v47
    %v304 = vmul.f32 %v297, %v48
    %v305 = vadd.f32 %v300, %v301
    %v306 = vadd.f32 %v305, %v302
    %v307 = vadd.f32 %v306, %v303
    %v308 = vadd.f32 %v307, %v304
    %v309 = vadd.f32 %v299, %v308
    %310 = vst [vmem:[%s298] sm:$0xff] %v309
    %s311 = scalar_lea.vmem [#allocation4], 24
    %v312 = vld [vmem:[%s311] sm:$0xff]
    %v313 = vadd.f32 %v293, %v294
    %v314 = vadd.f32 %v313, %v295
    %v315 = vadd.f32 %v314, %v296
    %v316 = vadd.f32 %v315, %v297
    %v317 = vadd.f32 %v312, %v316
    %318 = vst [vmem:[%s311] sm:$0xff] %v317
    // Predicated region
    $region22: #{_adaptive_loss_pallas.1} parent=1 // pred_check
      %p319 = pneg %p18
    $region23: #{_adaptive_loss_pallas.1} parent=1 // pred_check_branch
      %321 = sbr.rel (%p319) target = $region25
    $region24: #{_adaptive_loss_pallas.1} parent=1 // pred_region
      %s322 = smul.u32 0, 40
      %v323 = vstv %s322
      %v324 = vadd.s32 %v50, %v323
      %v325 = vadd.s32 %v51, %v323
      %v326 = vadd.s32 %v52, %v323
      %v327 = vadd.s32 %v53, %v323
      %v328 = vadd.s32 %v54, %v323
      %v329 = vmul.u32 %v324, 128
      %v330 = vmul.u32 %v325, 128
      %v331 = vmul.u32 %v326, 128
      %v332 = vmul.u32 %v327, 128
      %v333 = vmul.u32 %v328, 128
      %v334 = vadd.s32 %v329, %v56
      %v335 = vadd.s32 %v330, %v56
      %v336 = vadd.s32 %v331, %v56
      %v337 = vadd.s32 %v332, %v56
      %v338 = vadd.s32 %v333, %v56
      %vm339 = vcmp.ge.s32.totalorder %v334, 1
      %vm340 = vcmp.ge.s32.totalorder %v335, 1
      %vm341 = vcmp.ge.s32.totalorder %v336, 1
      %vm342 = vcmp.ge.s32.totalorder %v337, 1
      %vm343 = vcmp.ge.s32.totalorder %v338, 1
      %vm344 = vcmp.le.s32.totalorder %v334, 4999
      %vm345 = vcmp.le.s32.totalorder %v335, 4999
      %vm346 = vcmp.le.s32.totalorder %v336, 4999
      %vm347 = vcmp.le.s32.totalorder %v337, 4999
      %vm348 = vcmp.le.s32.totalorder %v338, 4999
      %vm349 = vmand %vm339, %vm344
      %vm350 = vmand %vm340, %vm345
      %vm351 = vmand %vm341, %vm346
      %vm352 = vmand %vm342, %vm347
      %vm353 = vmand %vm343, %vm348
      %vm354 = vcmp.ge.s32.totalorder %v334, 2
      %vm355 = vcmp.ge.s32.totalorder %v335, 2
      %vm356 = vcmp.ge.s32.totalorder %v336, 2
      %vm357 = vcmp.ge.s32.totalorder %v337, 2
      %vm358 = vcmp.ge.s32.totalorder %v338, 2
      %vm359 = vmand %vm354, %vm344
      %vm360 = vmand %vm355, %vm345
      %vm361 = vmand %vm356, %vm346
      %vm362 = vmand %vm357, %vm347
      %vm363 = vmand %vm358, %vm348
      %v364 = vsel %vm349, %v106, 0.0
      %v365 = vsel %vm350, %v107, 0.0
      %v366 = vsel %vm351, %v108, 0.0
      %v367 = vsel %vm352, %v109, 0.0
      %v368 = vsel %vm353, %v110, 0.0
      %v369 = vsel %vm349, %v145, 0.0
      %v370 = vsel %vm350, %v146, 0.0
      %v371 = vsel %vm351, %v147, 0.0
      %v372 = vsel %vm352, %v148, 0.0
      %v373 = vsel %vm353, %v149, 0.0
      %v374 = vand.u32 2147483647, %v364
      %v375 = vand.u32 2147483647, %v365
      %v376 = vand.u32 2147483647, %v366
      %v377 = vand.u32 2147483647, %v367
      %v378 = vand.u32 2147483647, %v368
      %v379 = vand.u32 2147483647, %v184
      %v380 = vand.u32 2147483647, %v185
      %v381 = vand.u32 2147483647, %v186
      %v382 = vand.u32 2147483647, %v187
      %v383 = vand.u32 2147483647, %v188
      %v384 = vsel %vm359, %v379, 0.0
      %v385 = vsel %vm360, %v380, 0.0
      %v386 = vsel %vm361, %v381, 0.0
      %v387 = vsel %vm362, %v382, 0.0
      %v388 = vsel %vm363, %v383, 0.0
      %s389 = scalar_lea.vmem [#allocation2], 16
      %v390 = vld [vmem:[%s389] sm:$0xff]
      %v391 = vadd.f32 %v374, %v375
      %v392 = vadd.f32 %v391, %v376
      %v393 = vadd.f32 %v392, %v377
      %v394 = vadd.f32 %v393, %v378
      %v395 = vadd.f32 %v390, %v394
      %396 = vst [vmem:[%s389] sm:$0xff] %v395
      %s397 = scalar_lea.vmem [#allocation2], 24
      %v398 = vld [vmem:[%s397] sm:$0xff]
      %v399 = vadd.f32 %v364, %v365
      %v400 = vadd.f32 %v399, %v366
      %v401 = vadd.f32 %v400, %v367
      %v402 = vadd.f32 %v401, %v368
      %v403 = vadd.f32 %v398, %v402
      %404 = vst [vmem:[%s397] sm:$0xff] %v403
      %s405 = scalar_lea.vmem [#allocation2], 32
      %v406 = vld [vmem:[%s405] sm:$0xff]
      %v407 = vmul.f32 %v364, %v364
      %v408 = vmul.f32 %v365, %v365
      %v409 = vmul.f32 %v366, %v366
      %v410 = vmul.f32 %v367, %v367
      %v411 = vmul.f32 %v368, %v368
      %v412 = vadd.f32 %v407, %v408
      %v413 = vadd.f32 %v412, %v409
      %v414 = vadd.f32 %v413, %v410
      %v415 = vadd.f32 %v414, %v411
      %v416 = vadd.f32 %v406, %v415
      %417 = vst [vmem:[%s405] sm:$0xff] %v416
      %s418 = scalar_lea.vmem [#allocation2], 40
      %v419 = vld [vmem:[%s418] sm:$0xff]
      %v420 = vadd.f32 %v369, %v370
      %v421 = vadd.f32 %v420, %v371
      %v422 = vadd.f32 %v421, %v372
      %v423 = vadd.f32 %v422, %v373
      %v424 = vadd.f32 %v419, %v423
      %425 = vst [vmem:[%s418] sm:$0xff] %v424
      %s426 = scalar_lea.vmem [#allocation2], 48
      %v427 = vld [vmem:[%s426] sm:$0xff]
      %v428 = vmul.f32 %v369, %v369
      %v429 = vmul.f32 %v370, %v370
      %v430 = vmul.f32 %v371, %v371
      %v431 = vmul.f32 %v372, %v372
      %v432 = vmul.f32 %v373, %v373
      %v433 = vadd.f32 %v428, %v429
      %v434 = vadd.f32 %v433, %v430
      %v435 = vadd.f32 %v434, %v431
      %v436 = vadd.f32 %v435, %v432
      %v437 = vadd.f32 %v427, %v436
      %438 = vst [vmem:[%s426] sm:$0xff] %v437
      %s439 = scalar_lea.vmem [#allocation2], 56
      %v440 = vld [vmem:[%s439] sm:$0xff]
      %v441 = vadd.f32 %v384, %v385
      %v442 = vadd.f32 %v441, %v386
      %v443 = vadd.f32 %v442, %v387
      %v444 = vadd.f32 %v443, %v388
      %v445 = vadd.f32 %v440, %v444
      %446 = vst [vmem:[%s439] sm:$0xff] %v445
    $region25: #{_adaptive_loss_pallas.1} parent=1 // pred_fallthru
      _
    %p447 = scmp.ne.s32.totalorder 0, 0
    // Predicated region
    $region26: #{_adaptive_loss_pallas.1} parent=1 // pred_check
      %p448 = pneg %p447
    $region27: #{_adaptive_loss_pallas.1} parent=1 // pred_check_branch
      %450 = sbr.rel (%p448) target = $region29
    $region28: #{_adaptive_loss_pallas.1} parent=1 // pred_region
      %v451 = vand.u32 2147483647, %v106
      %v452 = vand.u32 2147483647, %v107
      %v453 = vand.u32 2147483647, %v108
      %v454 = vand.u32 2147483647, %v109
      %v455 = vand.u32 2147483647, %v110
      %v456 = vand.u32 2147483647, %v184
      %v457 = vand.u32 2147483647, %v185
      %v458 = vand.u32 2147483647, %v186
      %v459 = vand.u32 2147483647, %v187
      %v460 = vand.u32 2147483647, %v188
      %s461 = scalar_lea.vmem [#allocation2], 16
      %v462 = vld [vmem:[%s461] sm:$0xff]
      %v463 = vadd.f32 %v451, %v452
      %v464 = vadd.f32 %v463, %v453
      %v465 = vadd.f32 %v464, %v454
      %v466 = vadd.f32 %v465, %v455
      %v467 = vadd.f32 %v462, %v466
      %468 = vst [vmem:[%s461] sm:$0xff] %v467
      %s469 = scalar_lea.vmem [#allocation2], 24
      %v470 = vld [vmem:[%s469] sm:$0xff]
      %v471 = vadd.f32 %v106, %v107
      %v472 = vadd.f32 %v471, %v108
      %v473 = vadd.f32 %v472, %v109
      %v474 = vadd.f32 %v473, %v110
      %v475 = vadd.f32 %v470, %v474
      %476 = vst [vmem:[%s469] sm:$0xff] %v475
      %s477 = scalar_lea.vmem [#allocation2], 32
      %v478 = vld [vmem:[%s477] sm:$0xff]
      %v479 = vmul.f32 %v106, %v106
      %v480 = vmul.f32 %v107, %v107
      %v481 = vmul.f32 %v108, %v108
      %v482 = vmul.f32 %v109, %v109
      %v483 = vmul.f32 %v110, %v110
      %v484 = vadd.f32 %v479, %v480
      %v485 = vadd.f32 %v484, %v481
      %v486 = vadd.f32 %v485, %v482
      %v487 = vadd.f32 %v486, %v483
      %v488 = vadd.f32 %v478, %v487
      %489 = vst [vmem:[%s477] sm:$0xff] %v488
      %s490 = scalar_lea.vmem [#allocation2], 40
      %v491 = vld [vmem:[%s490] sm:$0xff]
      %v492 = vadd.f32 %v145, %v146
      %v493 = vadd.f32 %v492, %v147
      %v494 = vadd.f32 %v493, %v148
      %v495 = vadd.f32 %v494, %v149
      %v496 = vadd.f32 %v491, %v495
      %497 = vst [vmem:[%s490] sm:$0xff] %v496
      %s498 = scalar_lea.vmem [#allocation2], 48
      %v499 = vld [vmem:[%s498] sm:$0xff]
      %v500 = vmul.f32 %v145, %v145
      %v501 = vmul.f32 %v146, %v146
      %v502 = vmul.f32 %v147, %v147
      %v503 = vmul.f32 %v148, %v148
      %v504 = vmul.f32 %v149, %v149
      %v505 = vadd.f32 %v500, %v501
      %v506 = vadd.f32 %v505, %v502
      %v507 = vadd.f32 %v506, %v503
      %v508 = vadd.f32 %v507, %v504
      %v509 = vadd.f32 %v499, %v508
      %510 = vst [vmem:[%s498] sm:$0xff] %v509
      %s511 = scalar_lea.vmem [#allocation2], 56
      %v512 = vld [vmem:[%s511] sm:$0xff]
      %v513 = vadd.f32 %v456, %v457
      %v514 = vadd.f32 %v513, %v458
      %v515 = vadd.f32 %v514, %v459
      %v516 = vadd.f32 %v515, %v460
      %v517 = vadd.f32 %v512, %v516
      %518 = vst [vmem:[%s511] sm:$0xff] %v517
    $region29: #{_adaptive_loss_pallas.1} parent=1 // pred_fallthru
      _
    %520 = vrot.lane.b32.xlu0 %v43, 1
    %v521 = vpop.permute.xlu0 %520
    %vm523 = vcmask 7175
    %524 = vst.msk [vmem:[#allocation5 - $0x7] sm:$0x80] %vm523, %v521
    %v525 = vsub.f32 %v43, %v521
    %527 = vrot.lane.b32.xlu0 %v525, 1
    %v528 = vpop.permute.xlu0 %527
    %530 = vst.msk [vmem:[#allocation5 - $0x6] sm:$0x80] %vm523, %v528
    %532 = vrot.lane.b32.xlu0 %v48, 1
    %v533 = vpop.permute.xlu0 %532
    %535 = vst.msk [vmem:[#allocation5 - $0x5] sm:$0x80] %vm523, %v533
    // Predicated region
    $region30: #{_adaptive_loss_pallas.1} parent=1 // pred_check
      %p536 = pneg %p18
    $region31: #{_adaptive_loss_pallas.1} parent=1 // pred_check_branch
      %538 = sbr.rel (%p536) target = $region33
    $region32: #{_adaptive_loss_pallas.1} parent=1 // pred_region
      %v539 = vld [vmem:[#allocation2] sm:$0xff]
      %540 = vadd.xlane.f32.xlu0 %v539
      %v541 = vpop.xlane.xlu0 %540
      %v542 = vrot.slane %v541, 4
      %v543 = vadd.f32 %v541, %v542
      %v544 = vrot.slane %v543, 2
      %v545 = vadd.f32 %v543, %v544
      %v546 = vrot.slane %v545, 1
      %v547 = vadd.f32 %v545, %v546
      %s548 = vtos %v547
      %v549 = vld [vmem:[%s206] sm:$0xff]
      %550 = vadd.xlane.f32.xlu0 %v549
      %v551 = vpop.xlane.xlu0 %550
      %v552 = vrot.slane %v551, 4
      %v553 = vadd.f32 %v551, %v552
      %v554 = vrot.slane %v553, 2
      %v555 = vadd.f32 %v553, %v554
      %v556 = vrot.slane %v555, 1
      %v557 = vadd.f32 %v555, %v556
      %s558 = vtos %v557
      %s559 = scalar_lea.vmem [#allocation2], 16
      %v560 = vld [vmem:[%s559] sm:$0xff]
      %561 = vadd.xlane.f32.xlu0 %v560
      %v562 = vpop.xlane.xlu0 %561
      %v563 = vrot.slane %v562, 4
      %v564 = vadd.f32 %v562, %v563
      %v565 = vrot.slane %v564, 2
      %v566 = vadd.f32 %v564, %v565
      %v567 = vrot.slane %v566, 1
      %v568 = vadd.f32 %v566, %v567
      %s569 = vtos %v568
      %s570 = scalar_lea.vmem [#allocation2], 24
      %v571 = vld [vmem:[%s570] sm:$0xff]
      %572 = vadd.xlane.f32.xlu0 %v571
      %v573 = vpop.xlane.xlu0 %572
      %v574 = vrot.slane %v573, 4
      %v575 = vadd.f32 %v573, %v574
      %v576 = vrot.slane %v575, 2
      %v577 = vadd.f32 %v575, %v576
      %v578 = vrot.slane %v577, 1
      %v579 = vadd.f32 %v577, %v578
      %s580 = vtos %v579
      %s581 = scalar_lea.vmem [#allocation2], 32
      %v582 = vld [vmem:[%s581] sm:$0xff]
      %583 = vadd.xlane.f32.xlu0 %v582
      %v584 = vpop.xlane.xlu0 %583
      %v585 = vrot.slane %v584, 4
      %v586 = vadd.f32 %v584, %v585
      %v587 = vrot.slane %v586, 2
      %v588 = vadd.f32 %v586, %v587
      %v589 = vrot.slane %v588, 1
      %v590 = vadd.f32 %v588, %v589
      %s591 = vtos %v590
      %s592 = scalar_lea.vmem [#allocation2], 40
      %v593 = vld [vmem:[%s592] sm:$0xff]
      %594 = vadd.xlane.f32.xlu0 %v593
      %v595 = vpop.xlane.xlu0 %594
      %v596 = vrot.slane %v595, 4
      %v597 = vadd.f32 %v595, %v596
      %v598 = vrot.slane %v597, 2
      %v599 = vadd.f32 %v597, %v598
      %v600 = vrot.slane %v599, 1
      %v601 = vadd.f32 %v599, %v600
      %s602 = vtos %v601
      %s603 = scalar_lea.vmem [#allocation2], 48
      %v604 = vld [vmem:[%s603] sm:$0xff]
      %605 = vadd.xlane.f32.xlu0 %v604
      %v606 = vpop.xlane.xlu0 %605
      %v607 = vrot.slane %v606, 4
      %v608 = vadd.f32 %v606, %v607
      %v609 = vrot.slane %v608, 2
      %v610 = vadd.f32 %v608, %v609
      %v611 = vrot.slane %v610, 1
      %v612 = vadd.f32 %v610, %v611
      %s613 = vtos %v612
      %s614 = scalar_lea.vmem [#allocation2], 56
      %v615 = vld [vmem:[%s614] sm:$0xff]
      %616 = vadd.xlane.f32.xlu0 %v615
      %v617 = vpop.xlane.xlu0 %616
      %v618 = vrot.slane %v617, 4
      %v619 = vadd.f32 %v617, %v618
      %v620 = vrot.slane %v619, 2
      %v621 = vadd.f32 %v619, %v620
      %v622 = vrot.slane %v621, 1
      %v623 = vadd.f32 %v621, %v622
      %s624 = vtos %v623
      %s625 = smul.f32 %s548, 0.0002
      %v626 = vrcp.pop 4999.0
      %v627 = vmul.f32 4999.0, %v626
      %v628 = vsub.f32 1.0, %v627
      %v629 = vmul.f32 %v626, %v628
      %v630 = vadd.f32 %v626, %v629
      %vm631 = vweird.f32 %v626
      %v632 = vsel %vm631, %v626, %v630
      %s633 = vtos %v632
      %s634 = smul.f32 %s569, %s633
      %s635 = smul.f32 %s580, %s580
      %v636 = vrcp.pop 4999.0
      %v637 = vmul.f32 4999.0, %v636
      %v638 = vsub.f32 1.0, %v637
      %v639 = vmul.f32 %v636, %v638
      %v640 = vadd.f32 %v636, %v639
      %vm641 = vweird.f32 %v636
      %v642 = vsel %vm641, %v636, %v640
      %s643 = vtos %v642
      %s644 = smul.f32 %s635, %s643
      %s645 = ssub.f32 %s591, %s644
      %v646 = vrcp.pop 4998.0
      %v647 = vmul.f32 4998.0, %v646
      %v648 = vsub.f32 1.0, %v647
      %v649 = vmul.f32 %v646, %v648
      %v650 = vadd.f32 %v646, %v649
      %vm651 = vweird.f32 %v646
      %v652 = vsel %vm651, %v646, %v650
      %s653 = vtos %v652
      %s654 = smul.f32 %s645, %s653
      %s655 = smul.f32 %s602, %s602
      %v656 = vrcp.pop 4999.0
      %v657 = vmul.f32 4999.0, %v656
      %v658 = vsub.f32 1.0, %v657
      %v659 = vmul.f32 %v656, %v658
      %v660 = vadd.f32 %v656, %v659
      %vm661 = vweird.f32 %v656
      %v662 = vsel %vm661, %v656, %v660
      %s663 = vtos %v662
      %s664 = smul.f32 %s655, %s663
      %s665 = ssub.f32 %s613, %s664
      %v666 = vrcp.pop 4998.0
      %v667 = vmul.f32 4998.0, %v666
      %v668 = vsub.f32 1.0, %v667
      %v669 = vmul.f32 %v666, %v668
      %v670 = vadd.f32 %v666, %v669
      %vm671 = vweird.f32 %v666
      %v672 = vsel %vm671, %v666, %v670
      %s673 = vtos %v672
      %s674 = smul.f32 %s665, %s673
      %s675 = smax.f32 %s654, 0.0
      %v676 = vstv %s675
      %v677 = vrsqrt.pop %v676
      %v678 = vmul.f32 %v677, %v676
      %v679 = vmul.f32 %v678, %v677
      %v680 = vmul.f32 0.5, %v679
      %v681 = vsub.f32 1.5, %v680
      %v682 = vmul.f32 %v677, %v681
      %v683 = vmul.f32 %v676, %v682
      %vm684 = vcmp.eq.f32.partialorder %v676, inf
      %v685 = vsel %vm684, %v676, %v683
      %vm686 = vcmp.eq.f32.partialorder %v676, 0.0
      %v687 = vand.u32 %v676, 2147483648
      %v688 = vsel %vm686, %v687, %v685
      %s689 = vtos %v688
      %s690 = smax.f32 %s674, 0.0
      %v691 = vstv %s690
      %v692 = vrsqrt.pop %v691
      %v693 = vmul.f32 %v692, %v691
      %v694 = vmul.f32 %v693, %v692
      %v695 = vmul.f32 0.5, %v694
      %v696 = vsub.f32 1.5, %v695
      %v697 = vmul.f32 %v692, %v696
      %v698 = vmul.f32 %v691, %v697
      %vm699 = vcmp.eq.f32.partialorder %v691, inf
      %v700 = vsel %vm699, %v691, %v698
      %vm701 = vcmp.eq.f32.partialorder %v691, 0.0
      %v702 = vand.u32 %v691, 2147483648
      %v703 = vsel %vm701, %v702, %v700
      %s704 = vtos %v703
      %s705 = ssub.f32 %s689, %s704
      %s706 = sand.u32 2147483647, %s705
      %v707 = vrcp.pop 4998.0
      %v708 = vmul.f32 4998.0, %v707
      %v709 = vsub.f32 1.0, %v708
      %v710 = vmul.f32 %v707, %v709
      %v711 = vadd.f32 %v707, %v710
      %vm712 = vweird.f32 %v707
      %v713 = vsel %vm712, %v707, %v711
      %s714 = vtos %v713
      %s715 = smul.f32 %s624, %s714
      %v716 = vld [vmem:[#allocation3] sm:$0xff]
      %717 = vadd.xlane.f32.xlu0 %v716
      %v718 = vpop.xlane.xlu0 %717
      %v719 = vrot.slane %v718, 4
      %v720 = vadd.f32 %v718, %v719
      %v721 = vrot.slane %v720, 2
      %v722 = vadd.f32 %v720, %v721
      %v723 = vrot.slane %v722, 1
      %v724 = vadd.f32 %v722, %v723
      %s725 = vtos %v724
      %v726 = vld [vmem:[#allocation4] sm:$0xff]
      %727 = vadd.xlane.f32.xlu0 %v726
      %v728 = vpop.xlane.xlu0 %727
      %v729 = vrot.slane %v728, 4
      %v730 = vadd.f32 %v728, %v729
      %v731 = vrot.slane %v730, 2
      %v732 = vadd.f32 %v730, %v731
      %v733 = vrot.slane %v732, 1
      %v734 = vadd.f32 %v732, %v733
      %s735 = vtos %v734
      %s736 = smul.f32 %s735, %s558
      %s737 = smul.f32 %s736, 0.0002
      %s738 = ssub.f32 %s725, %s737
      %s739 = smul.f32 %s738, 0.0002
      %s740 = sand.u32 2147483647, %s739
      %vm741 = vcmp.eq.s32.totalorder %v56, 1
      %v742 = vstv %s740
      %v743 = vsel %vm741, %v742, 0.0
      %v744 = vld [vmem:[%s244] sm:$0xff]
      %745 = vadd.xlane.f32.xlu0 %v744
      %v746 = vpop.xlane.xlu0 %745
      %v747 = vrot.slane %v746, 4
      %v748 = vadd.f32 %v746, %v747
      %v749 = vrot.slane %v748, 2
      %v750 = vadd.f32 %v748, %v749
      %v751 = vrot.slane %v750, 1
      %v752 = vadd.f32 %v750, %v751
      %s753 = vtos %v752
      %v754 = vld [vmem:[%s257] sm:$0xff]
      %755 = vadd.xlane.f32.xlu0 %v754
      %v756 = vpop.xlane.xlu0 %755
      %v757 = vrot.slane %v756, 4
      %v758 = vadd.f32 %v756, %v757
      %v759 = vrot.slane %v758, 2
      %v760 = vadd.f32 %v758, %v759
      %v761 = vrot.slane %v760, 1
      %v762 = vadd.f32 %v760, %v761
      %s763 = vtos %v762
      %s764 = smul.f32 %s763, %s558
      %s765 = smul.f32 %s764, 0.0002
      %s766 = ssub.f32 %s753, %s765
      %s767 = smul.f32 %s766, 0.0002
      %s768 = sand.u32 2147483647, %s767
      %vm769 = vcmp.eq.s32.totalorder %v56, 2
      %v770 = vstv %s768
      %v771 = vsel %vm769, %v770, %v743
      %v772 = vld [vmem:[%s271] sm:$0xff]
      %773 = vadd.xlane.f32.xlu0 %v772
      %v774 = vpop.xlane.xlu0 %773
      %v775 = vrot.slane %v774, 4
      %v776 = vadd.f32 %v774, %v775
      %v777 = vrot.slane %v776, 2
      %v778 = vadd.f32 %v776, %v777
      %v779 = vrot.slane %v778, 1
      %v780 = vadd.f32 %v778, %v779
      %s781 = vtos %v780
      %v782 = vld [vmem:[%s284] sm:$0xff]
      %783 = vadd.xlane.f32.xlu0 %v782
      %v784 = vpop.xlane.xlu0 %783
      %v785 = vrot.slane %v784, 4
      %v786 = vadd.f32 %v784, %v785
      %v787 = vrot.slane %v786, 2
      %v788 = vadd.f32 %v786, %v787
      %v789 = vrot.slane %v788, 1
      %v790 = vadd.f32 %v788, %v789
      %s791 = vtos %v790
      %s792 = smul.f32 %s791, %s558
      %s793 = smul.f32 %s792, 0.0002
      %s794 = ssub.f32 %s781, %s793
      %s795 = smul.f32 %s794, 0.0002
      %s796 = sand.u32 2147483647, %s795
      %vm797 = vcmp.eq.s32.totalorder %v56, 3
      %v798 = vstv %s796
      %v799 = vsel %vm797, %v798, %v771
      %v800 = vld [vmem:[%s298] sm:$0xff]
      %801 = vadd.xlane.f32.xlu0 %v800
      %v802 = vpop.xlane.xlu0 %801
      %v803 = vrot.slane %v802, 4
      %v804 = vadd.f32 %v802, %v803
      %v805 = vrot.slane %v804, 2
      %v806 = vadd.f32 %v804, %v805
      %v807 = vrot.slane %v806, 1
      %v808 = vadd.f32 %v806, %v807
      %s809 = vtos %v808
      %v810 = vld [vmem:[%s311] sm:$0xff]
      %811 = vadd.xlane.f32.xlu0 %v810
      %v812 = vpop.xlane.xlu0 %811
      %v813 = vrot.slane %v812, 4
      %v814 = vadd.f32 %v812, %v813
      %v815 = vrot.slane %v814, 2
      %v816 = vadd.f32 %v814, %v815
      %v817 = vrot.slane %v816, 1
      %v818 = vadd.f32 %v816, %v817
      %s819 = vtos %v818
      %s820 = smul.f32 %s819, %s558
      %s821 = smul.f32 %s820, 0.0002
      %s822 = ssub.f32 %s809, %s821
      %s823 = smul.f32 %s822, 0.0002
      %s824 = sand.u32 2147483647, %s823
      %vm825 = vcmp.eq.s32.totalorder %v56, 4
      %v826 = vstv %s824
      %v827 = vsel %vm825, %v826, %v799
      %v828 = vld [vmem:[%s3] sm:$0x1]
      %v829 = vmul.f32 %v828, %v827
      %vm830 = vcmask 1040384
      %v831 = vsel %vm830, %v829, 0.0
      %832 = vadd.xlane.f32.xlu0 %v831
      %v833 = vpop.xlane.xlu0 %832
      %v834 = vrot.slane %v833, 4
      %v835 = vadd.f32 %v833, %v834
      %v836 = vrot.slane %v835, 2
      %v837 = vadd.f32 %v835, %v836
      %v838 = vrot.slane %v837, 1
      %v839 = vadd.f32 %v837, %v838
      %s840 = vtos %v839
      %s841 = sadd.f32 %s625, %s840
      %s842 = smul.f32 %s634, 0.005
      %s843 = sadd.f32 %s841, %s842
      %s844 = smul.f32 %s706, 0.002
      %s845 = sadd.f32 %s843, %s844
      %s846 = smul.f32 %s715, 0.001
      %s847 = sadd.f32 %s845, %s846
      %v848 = vstv %s847
      %v849 = vsel %vm62, %v848, %v827
      %vm850 = vcmp.eq.s32.totalorder %v56, 5
      %v851 = vstv %s634
      %v852 = vsel %vm850, %v851, %v849
      %vm853 = vcmp.eq.s32.totalorder %v56, 6
      %v854 = vstv %s706
      %v855 = vsel %vm853, %v854, %v852
      %vm856 = vcmp.eq.s32.totalorder %v56, 7
      %v857 = vstv %s715
      %v858 = vsel %vm856, %v857, %v855
      %859 = vst [vmem:[#allocation6] sm:$0x1] %v858
    $region33: #{_adaptive_loss_pallas.1} parent=1 // pred_fallthru
      _
    // Predicated region
    $region34: #{_adaptive_loss_pallas.1} parent=1 // pred_check
      _
    $region35: #{_adaptive_loss_pallas.1} parent=1 // pred_check_branch
      %861 = sbr.rel (0) target = $region37
    $region36: #{_adaptive_loss_pallas.1} parent=1 // pred_region
      %863 = vsyncadd [#allocation7], 0
      %s865 = sshll.u32 [#allocation6], 4
      %s866 = int_to_ptr.vmem [resolvable:$true] %s865
      %s867 = sshll.u32 %s4, 4
      %s868 = int_to_ptr.hbm [resolvable:$true] %s867
      %870 = dma.vmem_to_hbm [thread:$0]  %s866, 16, %s868, [#allocation7]
    $region37: #{_adaptive_loss_pallas.1} parent=1 // pred_fallthru
      _
    // Predicated region
    $region38: #{_adaptive_loss_pallas.1} parent=1 // pred_check
      _
    $region39: #{_adaptive_loss_pallas.1} parent=1 // pred_check_branch
      %872 = sbr.rel (0) target = $region41
    $region40: #{_adaptive_loss_pallas.1} parent=1 // pred_region
      %874 = dma.done [#allocation7], 16
    $region41: #{_adaptive_loss_pallas.1} parent=1 // pred_fallthru
      _
    %875 = vsyncpa [#allocation7], 1

</llo_original>
